<compile_context>
chip_gen: v6e
topology: v6e:2x2x1
jax: 0.10.0
libtpu: 0.0.40
codegen_flags: <defaults>
</compile_context>

<pallas_src>
import math
import functools

import jax
import jax.numpy as jnp
from jax import lax
from jax.experimental import pallas as pl
from jax.experimental.pallas import tpu as pltpu


_FALLBACK_VMEM_CAP = 64 << 20  # conservative: v7x per-TensorCore VMEM


def _vmem_capacity_bytes():
    try:
        return int(pltpu.get_tpu_info().vmem_capacity_bytes)
    except Exception:
        return _FALLBACK_VMEM_CAP


def _vmem_limit(est_bytes, cap_bytes):
    headroom = 8 << 20
    limit = max(int(1.25 * est_bytes) + (4 << 20), 32 << 20)
    return int(min(limit, cap_bytes - headroom))


# ---------------------------------------------------------------------------
# Path A: K/V fully resident in VMEM, query axis tiled.
# ---------------------------------------------------------------------------
def _resident_kernel(q_ref, k_ref, v_ref, ctx_ref, attn_ref, *, scale):
    # q_ref: (1, 1, TQ, D), k_ref/v_ref: (1, 1, Sk, D)
    q = q_ref[0, 0] * scale          # fold 1/sqrt(d_k) into Q (Sq*D muls, not Sq*Sk)
    k = k_ref[0, 0]
    v = v_ref[0, 0]

    # scores (TQ, Sk): contract the D axes directly -> MXU without a transpose.
    scores = lax.dot_general(
        q, k,
        dimension_numbers=(((1,), (1,)), ((), ())),
        preferred_element_type=jnp.float32,
    )

    # Numerically-stable softmax over keys, f32 throughout.
    m = jnp.max(scores, axis=-1, keepdims=True)
    e = jnp.exp(scores - m)
    denom = jnp.sum(e, axis=-1, keepdims=True)
    attn = e * pl.reciprocal(denom, approx=False)   # divide -> EUP reciprocal + VPU mul

    ctx = jnp.dot(attn.astype(v.dtype), v, preferred_element_type=jnp.float32)

    attn_ref[0, 0] = attn.astype(attn_ref.dtype)
    ctx_ref[0, 0] = ctx.astype(ctx_ref.dtype)


def _run_resident(Q, K, V, scale, tq, attn_dtype, kv_buffer_count, vmem_cap):
    B, H, Sq, D = Q.shape
    Sk = K.shape[2]
    in_b = jnp.dtype(Q.dtype).itemsize
    attn_b = jnp.dtype(attn_dtype).itemsize

    est = (kv_buffer_count * 2 * Sk * D * in_b   # K + V blocks
           + 2 * tq * D * in_b                   # Q block (double-buffered)
           + 2 * tq * D * in_b                   # ctx out block (double-buffered)
           + 2 * tq * Sk * attn_b                # attn out block (double-buffered)
           + 4 * tq * Sk * 4)                    # f32 scores/exp temporaries + slack
    vmem_limit = _vmem_limit(est, vmem_cap)

    # K/V block index is constant across the innermost qi axis, so double
    # buffering only helps at (b, h) boundaries -> request a single buffer.
    kv_kwargs = {"pipeline_mode": pl.Buffered(1)} if kv_buffer_count == 1 else {}

    kernel = functools.partial(_resident_kernel, scale=scale)
    nq = Sq // tq
    grid = (B, H, nq)
    in_specs = [
        pl.BlockSpec((1, 1, tq, D), lambda b, h, qi: (b, h, qi, 0)),
        pl.BlockSpec((1, 1, Sk, D), lambda b, h, qi: (b, h, 0, 0), **kv_kwargs),
        pl.BlockSpec((1, 1, Sk, D), lambda b, h, qi: (b, h, 0, 0), **kv_kwargs),
    ]
    out_specs = [
        pl.BlockSpec((1, 1, tq, D), lambda b, h, qi: (b, h, qi, 0)),
        pl.BlockSpec((1, 1, tq, Sk), lambda b, h, qi: (b, h, qi, 0)),
    ]
    out_shape = [
        jax.ShapeDtypeStruct((B, H, Sq, D), Q.dtype),
        jax.ShapeDtypeStruct((B, H, Sq, Sk), attn_dtype),
    ]

    ctx, attn = pl.pallas_call(
        kernel,
        grid=grid,
        in_specs=in_specs,
        out_specs=out_specs,
        out_shape=out_shape,
        compiler_params=pltpu.CompilerParams(
            # qi "arbitrary": bias a v7x megacore split onto B/H so each core
            # fetches K/V once per (b, h) instead of duplicating the DMA.
            dimension_semantics=("parallel", "parallel", "arbitrary"),
            vmem_limit_bytes=vmem_limit,
        ),
    )(Q, K, V)
    return ctx, attn


# ---------------------------------------------------------------------------
# Path B: key-axis tiled (long context).  Pass 1: flash-style context + lse.
# Pass 2: attn = exp(scores - lse), tile-parallel.
# ---------------------------------------------------------------------------
def _flash_ctx_kernel(q_ref, k_ref, v_ref, ctx_ref, lse_ref,
                      m_sc, l_sc, acc_sc, *, scale):
    ki = pl.program_id(3)

    @pl.when(ki == 0)
    def _():
        m_sc[...] = jnp.full(m_sc.shape, -jnp.inf, m_sc.dtype)
        l_sc[...] = jnp.zeros(l_sc.shape, l_sc.dtype)
        acc_sc[...] = jnp.zeros(acc_sc.shape, acc_sc.dtype)

    q = q_ref[0, 0] * scale
    k = k_ref[0, 0]
    v = v_ref[0, 0]

    s = lax.dot_general(
        q, k,
        dimension_numbers=(((1,), (1,)), ((), ())),
        preferred_element_type=jnp.float32,
    )

    m_prev = m_sc[...]
    m_new = jnp.maximum(m_prev, jnp.max(s, axis=-1, keepdims=True))
    alpha = jnp.exp(m_prev - m_new)
    p = jnp.exp(s - m_new)
    l_sc[...] = alpha * l_sc[...] + jnp.sum(p, axis=-1, keepdims=True)
    acc_sc[...] = alpha * acc_sc[...] + jnp.dot(
        p.astype(v.dtype), v, preferred_element_type=jnp.float32)
    m_sc[...] = m_new

    @pl.when(ki == pl.num_programs(3) - 1)
    def _():
        inv_l = pl.reciprocal(l_sc[...], approx=False)
        ctx_ref[0, 0] = (acc_sc[...] * inv_l).astype(ctx_ref.dtype)
        lse_ref[0, 0] = (m_sc[...] + jnp.log(l_sc[...])).astype(lse_ref.dtype)


def _attn_weights_kernel(q_ref, k_ref, lse_ref, attn_ref, *, scale):
    q = q_ref[0, 0] * scale
    k = k_ref[0, 0]
    s = lax.dot_general(
        q, k,
        dimension_numbers=(((1,), (1,)), ((), ())),
        preferred_element_type=jnp.float32,
    )
    attn_ref[0, 0] = jnp.exp(s - lse_ref[0, 0]).astype(attn_ref.dtype)


def _run_flash(Q, K, V, scale, tq, tk, attn_dtype, vmem_cap):
    B, H, Sq, D = Q.shape
    Sk = K.shape[2]
    in_b = jnp.dtype(Q.dtype).itemsize
    attn_b = jnp.dtype(attn_dtype).itemsize
    nq, nk = Sq // tq, Sk // tk

    # ---- pass 1: context + per-row logsumexp -------------------------------
    est1 = (4 * tk * D * in_b              # K, V blocks (double-buffered)
            + 2 * tq * D * in_b            # Q block
            + 2 * tq * D * in_b            # ctx out block
            + 2 * tq * 4                   # lse out block
            + 2 * tq * 4 + tq * D * 4      # m/l/acc scratch
            + 4 * tq * tk * 4)             # f32 temporaries + slack
    kernel1 = functools.partial(_flash_ctx_kernel, scale=scale)
    ctx, lse = pl.pallas_call(
        kernel1,
        grid=(B, H, nq, nk),
        in_specs=[
            pl.BlockSpec((1, 1, tq, D), lambda b, h, qi, ki: (b, h, qi, 0)),
            pl.BlockSpec((1, 1, tk, D), lambda b, h, qi, ki: (b, h, ki, 0)),
            pl.BlockSpec((1, 1, tk, D), lambda b, h, qi, ki: (b, h, ki, 0)),
        ],
        out_specs=[
            pl.BlockSpec((1, 1, tq, D), lambda b, h, qi, ki: (b, h, qi, 0)),
            pl.BlockSpec((1, 1, tq, 1), lambda b, h, qi, ki: (b, h, qi, 0)),
        ],
        out_shape=[
            jax.ShapeDtypeStruct((B, H, Sq, D), Q.dtype),
            jax.ShapeDtypeStruct((B, H, Sq, 1), jnp.float32),
        ],
        scratch_shapes=[
            pltpu.VMEM((tq, 1), jnp.float32),   # running max
            pltpu.VMEM((tq, 1), jnp.float32),   # running sum
            pltpu.VMEM((tq, D), jnp.float32),   # context accumulator
        ],
        compiler_params=pltpu.CompilerParams(
            dimension_semantics=("parallel", "parallel", "arbitrary", "arbitrary"),
            vmem_limit_bytes=_vmem_limit(est1, vmem_cap),
        ),
    )(Q, K, V)

    # ---- pass 2: attention weights from lse --------------------------------
    est2 = (4 * tk * D * in_b + 2 * tq * D * in_b + 2 * tq * 4
            + 2 * tq * tk * attn_b + 3 * tq * tk * 4)
    kernel2 = functools.partial(_attn_weights_kernel, scale=scale)
    attn = pl.pallas_call(
        kernel2,
        grid=(B, H, nq, nk),
        in_specs=[
            pl.BlockSpec((1, 1, tq, D), lambda b, h, qi, ki: (b, h, qi, 0)),
            pl.BlockSpec((1, 1, tk, D), lambda b, h, qi, ki: (b, h, ki, 0)),
            pl.BlockSpec((1, 1, tq, 1), lambda b, h, qi, ki: (b, h, qi, 0)),
        ],
        out_specs=pl.BlockSpec((1, 1, tq, tk), lambda b, h, qi, ki: (b, h, qi, ki)),
        out_shape=jax.ShapeDtypeStruct((B, H, Sq, Sk), attn_dtype),
        compiler_params=pltpu.CompilerParams(
            dimension_semantics=("parallel", "parallel", "parallel", "arbitrary"),
            vmem_limit_bytes=_vmem_limit(est2, vmem_cap),
        ),
    )(Q, K, lse)
    return ctx, attn


# ---------------------------------------------------------------------------
# Tile-plan selection (generation-aware via the VMEM budget).
# ---------------------------------------------------------------------------
def _select_plan(Sq, Sk, D, in_dtype, attn_dtype, budget):
    in_b = jnp.dtype(in_dtype).itemsize
    attn_b = jnp.dtype(attn_dtype).itemsize

    if in_b < 4:
        cands = [512, 256, 128, 64, 32, 16]       # bf16/f16: keep sublane packing
    else:
        cands = [512, 256, 128, 64, 32, 16, 8]
    tq_cands = [t for t in cands if t <= Sq and Sq % t == 0]
    if Sq not in tq_cands:
        tq_cands.append(Sq)                       # full-extent fallback is always legal

    def resident_bytes(t):
        return (2 * Sk * D * in_b                 # K + V (single-buffered)
                + 2 * t * D * in_b                # Q block
                + 2 * t * D * in_b                # ctx out block
                + 2 * t * Sk * attn_b             # attn out block
                + 4 * t * Sk * 4)                 # f32 temporaries + slack

    for t in tq_cands:                            # largest tile that fits wins
        if resident_bytes(t) <= budget:
            return "resident", t, None

    # Key-axis tiling for long context (tk multiple of 128 keeps blocks layout-legal).
    tk_cands = [c for c in (2048, 1024, 512, 256, 128) if c <= Sk and Sk % c == 0]

    def flash_bytes(t, tk):
        pass1 = (4 * tk * D * in_b + 4 * t * D * in_b + 2 * t * 4
                 + 2 * t * 4 + t * D * 4 + 4 * t * tk * 4)
        pass2 = (4 * tk * D * in_b + 2 * t * D * in_b + 2 * t * 4
                 + 2 * t * tk * attn_b + 3 * t * tk * 4)
        return max(pass1, pass2)

    for t in tq_cands:
        for tk in tk_cands:
            if flash_bytes(t, tk) <= budget:
                return "flash", t, tk

    # Last resort: smallest resident tile; vmem_limit stays clamped to capacity.
    return "resident", min(tq_cands), None


def basic_attn(Q, K, V, d_k, *, tq=None, tk=None, attn_dtype=None):
    """Pallas TPU implementation of BasicAttn.forward.

    Q: (B, H, Sq, D), K/V: (B, H, Sk, D).
    Returns (context (B, H, Sq, D), attn (B, H, Sq, Sk)).
    attn_dtype: opt-in (e.g. jnp.bfloat16) to halve attn HBM writeback.
    """
    B, H, Sq, D = Q.shape
    Sk = K.shape[2]
    scale = 1.0 / math.sqrt(d_k)
    attn_dtype = jnp.dtype(Q.dtype if attn_dtype is None else attn_dtype)

    cap = _vmem_capacity_bytes()
    budget = (cap * 3) // 8      # ~48 MiB on 128 MiB chips (v5e/v6e), ~24 MiB on v7x

    if tq is not None and tk is not None:
        mode = "flash"
    elif tq is not None:
        mode = "resident"
    else:
        assert tk is None, "pass tq together with tk to force the Sk-tiled path"
        mode, tq, tk = _select_plan(Sq, Sk, D, Q.dtype, attn_dtype, budget)

    if mode == "resident":
        assert Sq % tq == 0 and (tq % 8 == 0 or tq == Sq), "bad q-tile size"
        try:
            return _run_resident(Q, K, V, scale, tq, attn_dtype, 1, cap)
        except Exception:
            # pl.Buffered(1) not supported on this build: retry with the default
            # double-buffered K/V (budget/vmem_limit recomputed inside).
            return _run_resident(Q, K, V, scale, tq, attn_dtype, 2, cap)
    else:
        assert Sq % tq == 0 and (tq % 8 == 0 or tq == Sq), "bad q-tile size"
        assert Sk % tk == 0 and (tk % 128 == 0 or tk == Sk), "bad k-tile size"
        return _run_flash(Q, K, V, scale, tq, tk, attn_dtype, cap)


def _reference(Q, K, V, d_k):
    scores = jnp.einsum("bhqd,bhkd->bhqk", Q, K) / math.sqrt(d_k)
    attn = jax.nn.softmax(scores, axis=-1)
    ctx = jnp.einsum("bhqk,bhkd->bhqd", attn, V)
    return ctx, attn


if __name__ == "__main__":
    # Case 1: resident-K/V path; tq=8 forces nq=4 so q-tiling is exercised.
    B, H, Sq, Sk, D = 2, 4, 32, 16, 32
    kq, kk, kv = jax.random.split(jax.random.PRNGKey(0), 3)
    Q = jax.random.normal(kq, (B, H, Sq, D), dtype=jnp.float32)
    K = jax.random.normal(kk, (B, H, Sk, D), dtype=jnp.float32)
    V = jax.random.normal(kv, (B, H, Sk, D), dtype=jnp.float32)

    ctx, attn = basic_attn(Q, K, V, D, tq=8)
    jax.block_until_ready((ctx, attn))
    ctx_ref, attn_ref = _reference(Q, K, V, D)
    assert jnp.allclose(ctx, ctx_ref, atol=2e-5, rtol=2e-5)
    assert jnp.allclose(attn, attn_ref, atol=2e-5, rtol=2e-5)

    # Case 2: long-context (Sk-tiled, flash-style) path, forced via tq/tk.
    B, H, Sq, Sk, D = 1, 2, 32, 256, 32
    kq, kk, kv = jax.random.split(jax.random.PRNGKey(0), 3)
    Q = jax.random.normal(kq, (B, H, Sq, D), dtype=jnp.float32)
    K = jax.random.normal(kk, (B, H, Sk, D), dtype=jnp.float32)
    V = jax.random.normal(kv, (B, H, Sk, D), dtype=jnp.float32)

    ctx2, attn2 = basic_attn(Q, K, V, D, tq=16, tk=128)
    jax.block_until_ready((ctx2, attn2))
    ctx2_ref, attn2_ref = _reference(Q, K, V, D)
    assert jnp.allclose(ctx2, ctx2_ref, atol=2e-5, rtol=2e-5)
    assert jnp.allclose(attn2, attn2_ref, atol=2e-5, rtol=2e-5)

    print("KERNEL_OK")
</pallas_src>

<mosaic_0001>
module attributes {stable_mosaic.version = 11 : i64} {
  func.func @_resident_kernel(%arg0: i32, %arg1: i32, %arg2: i32, %arg3: memref<1x1x8x32xf32, #tpu.memory_space<vmem>>, %arg4: memref<1x1x16x32xf32, #tpu.memory_space<vmem>>, %arg5: memref<1x1x16x32xf32, #tpu.memory_space<vmem>>, %arg6: memref<1x1x8x32xf32, #tpu.memory_space<vmem>>, %arg7: memref<1x1x8x16xf32, #tpu.memory_space<vmem>>) attributes {dimension_semantics = [#tpu.dimension_semantics<parallel>, #tpu.dimension_semantics<parallel>, #tpu.dimension_semantics<arbitrary>], iteration_bounds = array<i64: 2, 4, 4>, scalar_prefetch = 0 : i64, scratch_operands = 0 : i64, tpu.core_type = #tpu.core_type<tc>, window_params = [{transform_indices = @transform_0, window_bounds = array<i64: 1, 1, 8, 32>}, {pipeline_mode = #tpu.pipeline_mode<synchronous>, transform_indices = @transform_1, window_bounds = array<i64: 1, 1, 16, 32>}, {pipeline_mode = #tpu.pipeline_mode<synchronous>, transform_indices = @transform_2, window_bounds = array<i64: 1, 1, 16, 32>}, {transform_indices = @transform_3, window_bounds = array<i64: 1, 1, 8, 32>}, {transform_indices = @transform_4, window_bounds = array<i64: 1, 1, 8, 16>}]} {
    %c0 = arith.constant 0 : index
    %c0_0 = arith.constant 0 : index
    %c0_1 = arith.constant 0 : index
    %c0_2 = arith.constant 0 : index
    %0 = vector.load %arg3[%c0, %c0_0, %c0_1, %c0_2] : memref<1x1x8x32xf32, #tpu.memory_space<vmem>>, vector<1x1x8x32xf32>
    %1 = vector.shape_cast %0 : vector<1x1x8x32xf32> to vector<8x32xf32>
    %cst = arith.constant 0.176776692 : f32
    %2 = vector.broadcast %cst : f32 to vector<8x32xf32>
    %3 = arith.mulf %1, %2 : vector<8x32xf32>
    %c0_3 = arith.constant 0 : index
    %c0_4 = arith.constant 0 : index
    %c0_5 = arith.constant 0 : index
    %c0_6 = arith.constant 0 : index
    %4 = vector.load %arg4[%c0_3, %c0_4, %c0_5, %c0_6] : memref<1x1x16x32xf32, #tpu.memory_space<vmem>>, vector<1x1x16x32xf32>
    %5 = vector.shape_cast %4 : vector<1x1x16x32xf32> to vector<16x32xf32>
    %c0_7 = arith.constant 0 : index
    %c0_8 = arith.constant 0 : index
    %c0_9 = arith.constant 0 : index
    %c0_10 = arith.constant 0 : index
    %6 = vector.load %arg5[%c0_7, %c0_8, %c0_9, %c0_10] : memref<1x1x16x32xf32, #tpu.memory_space<vmem>>, vector<1x1x16x32xf32>
    %7 = vector.shape_cast %6 : vector<1x1x16x32xf32> to vector<16x32xf32>
    %cst_11 = arith.constant dense<0.000000e+00> : vector<8x16xf32>
    %8 = tpu.matmul %3, %5, %cst_11 {dimension_numbers = #tpu.dot_dimension_numbers<[1], [1], [0], [0], [0, 0, 1, 0], [], []>} : vector<8x32xf32>, vector<16x32xf32>, vector<8x16xf32> -> vector<8x16xf32>
    %cst_12 = arith.constant dense<0xFF800000> : vector<8xf32>
    %9 = vector.multi_reduction <maximumf>, %8, %cst_12 [1] : vector<8x16xf32> to vector<8xf32>
    %10 = vector.shape_cast %9 : vector<8xf32> to vector<8x1xf32>
    %11 = vector.broadcast %10 : vector<8x1xf32> to vector<8x16xf32>
    %12 = arith.subf %8, %11 : vector<8x16xf32>
    %13 = math.exp %12 : vector<8x16xf32>
    %cst_13 = arith.constant dense<0.000000e+00> : vector<8xf32>
    %14 = vector.multi_reduction <add>, %13, %cst_13 [1] : vector<8x16xf32> to vector<8xf32>
    %15 = vector.shape_cast %14 : vector<8xf32> to vector<8x1xf32>
    %16 = tpu.reciprocal %15 : vector<8x1xf32> -> vector<8x1xf32>
    %17 = vector.broadcast %16 : vector<8x1xf32> to vector<8x16xf32>
    %18 = arith.mulf %13, %17 : vector<8x16xf32>
    %cst_14 = arith.constant dense<0.000000e+00> : vector<8x32xf32>
    %19 = tpu.matmul %18, %7, %cst_14 {dimension_numbers = #tpu.dot_dimension_numbers<[1], [0], [0], [1], [0, 0, 1, 1], [], []>} : vector<8x16xf32>, vector<16x32xf32>, vector<8x32xf32> -> vector<8x32xf32>
    %c0_15 = arith.constant 0 : index
    %c0_16 = arith.constant 0 : index
    %c0_17 = arith.constant 0 : index
    %c0_18 = arith.constant 0 : index
    %20 = vector.load %arg7[%c0_15, %c0_16, %c0_17, %c0_18] : memref<1x1x8x16xf32, #tpu.memory_space<vmem>>, vector<1x1x8x16xf32>
    %21 = vector.shape_cast %20 : vector<1x1x8x16xf32> to vector<8x16xf32>
    %22 = vector.shape_cast %18 : vector<8x16xf32> to vector<1x1x8x16xf32>
    tpu.vector_store %arg7[%c0_15, %c0_16, %c0_17, %c0_18], %22 {strides = array<i32>} : memref<1x1x8x16xf32, #tpu.memory_space<vmem>>, vector<1x1x8x16xf32>,
    %c0_19 = arith.constant 0 : index
    %c0_20 = arith.constant 0 : index
    %c0_21 = arith.constant 0 : index
    %c0_22 = arith.constant 0 : index
    %23 = vector.load %arg6[%c0_19, %c0_20, %c0_21, %c0_22] : memref<1x1x8x32xf32, #tpu.memory_space<vmem>>, vector<1x1x8x32xf32>
    %24 = vector.shape_cast %23 : vector<1x1x8x32xf32> to vector<8x32xf32>
    %25 = vector.shape_cast %19 : vector<8x32xf32> to vector<1x1x8x32xf32>
    tpu.vector_store %arg6[%c0_19, %c0_20, %c0_21, %c0_22], %25 {strides = array<i32>} : memref<1x1x8x32xf32, #tpu.memory_space<vmem>>, vector<1x1x8x32xf32>,
    return
  }
  func.func @transform_0(%arg0: i32, %arg1: i32, %arg2: i32) -> (i32, i32, i32, i32) {
    %c0_i32 = arith.constant 0 : i32
    %c0_i32_0 = arith.constant 0 : i32
    return %arg0, %arg1, %arg2, %c0_i32 : i32, i32, i32, i32
  }
  func.func @transform_1(%arg0: i32, %arg1: i32, %arg2: i32) -> (i32, i32, i32, i32) {
    %c0_i32 = arith.constant 0 : i32
    %c0_i32_0 = arith.constant 0 : i32
    %c0_i32_1 = arith.constant 0 : i32
    return %arg0, %arg1, %c0_i32, %c0_i32_0 : i32, i32, i32, i32
  }
  func.func @transform_2(%arg0: i32, %arg1: i32, %arg2: i32) -> (i32, i32, i32, i32) {
    %c0_i32 = arith.constant 0 : i32
    %c0_i32_0 = arith.constant 0 : i32
    %c0_i32_1 = arith.constant 0 : i32
    return %arg0, %arg1, %c0_i32, %c0_i32_0 : i32, i32, i32, i32
  }
  func.func @transform_3(%arg0: i32, %arg1: i32, %arg2: i32) -> (i32, i32, i32, i32) {
    %c0_i32 = arith.constant 0 : i32
    %c0_i32_0 = arith.constant 0 : i32
    return %arg0, %arg1, %arg2, %c0_i32 : i32, i32, i32, i32
  }
  func.func @transform_4(%arg0: i32, %arg1: i32, %arg2: i32) -> (i32, i32, i32, i32) {
    %c0_i32 = arith.constant 0 : i32
    %c0_i32_0 = arith.constant 0 : i32
    return %arg0, %arg1, %arg2, %c0_i32 : i32, i32, i32, i32
  }
}

module attributes {stable_mosaic.version = 11 : i64} {
  func.func @_resident_kernel(%arg0: i32, %arg1: i32, %arg2: i32, %arg3: memref<1x1x8x32xf32, #tpu.memory_space<vmem>>, %arg4: memref<1x1x16x32xf32, #tpu.memory_space<vmem>>, %arg5: memref<1x1x16x32xf32, #tpu.memory_space<vmem>>, %arg6: memref<1x1x8x32xf32, #tpu.memory_space<vmem>>, %arg7: memref<1x1x8x16xf32, #tpu.memory_space<vmem>>) attributes {dimension_semantics = [#tpu.dimension_semantics<parallel>, #tpu.dimension_semantics<parallel>, #tpu.dimension_semantics<arbitrary>], iteration_bounds = array<i64: 2, 4, 4>, scalar_prefetch = 0 : i64, scratch_operands = 0 : i64, tpu.core_type = #tpu.core_type<tc>, window_params = [{transform_indices = @transform_0, window_bounds = array<i64: 1, 1, 8, 32>}, {transform_indices = @transform_1, window_bounds = array<i64: 1, 1, 16, 32>}, {transform_indices = @transform_2, window_bounds = array<i64: 1, 1, 16, 32>}, {transform_indices = @transform_3, window_bounds = array<i64: 1, 1, 8, 32>}, {transform_indices = @transform_4, window_bounds = array<i64: 1, 1, 8, 16>}]} {
    %c0 = arith.constant 0 : index
    %c0_0 = arith.constant 0 : index
    %c0_1 = arith.constant 0 : index
    %c0_2 = arith.constant 0 : index
    %0 = vector.load %arg3[%c0, %c0_0, %c0_1, %c0_2] : memref<1x1x8x32xf32, #tpu.memory_space<vmem>>, vector<1x1x8x32xf32>
    %1 = vector.shape_cast %0 : vector<1x1x8x32xf32> to vector<8x32xf32>
    %cst = arith.constant 0.176776692 : f32
    %2 = vector.broadcast %cst : f32 to vector<8x32xf32>
    %3 = arith.mulf %1, %2 : vector<8x32xf32>
    %c0_3 = arith.constant 0 : index
    %c0_4 = arith.constant 0 : index
    %c0_5 = arith.constant 0 : index
    %c0_6 = arith.constant 0 : index
    %4 = vector.load %arg4[%c0_3, %c0_4, %c0_5, %c0_6] : memref<1x1x16x32xf32, #tpu.memory_space<vmem>>, vector<1x1x16x32xf32>
    %5 = vector.shape_cast %4 : vector<1x1x16x32xf32> to vector<16x32xf32>
    %c0_7 = arith.constant 0 : index
    %c0_8 = arith.constant 0 : index
    %c0_9 = arith.constant 0 : index
    %c0_10 = arith.constant 0 : index
    %6 = vector.load %arg5[%c0_7, %c0_8, %c0_9, %c0_10] : memref<1x1x16x32xf32, #tpu.memory_space<vmem>>, vector<1x1x16x32xf32>
    %7 = vector.shape_cast %6 : vector<1x1x16x32xf32> to vector<16x32xf32>
    %cst_11 = arith.constant dense<0.000000e+00> : vector<8x16xf32>
    %8 = tpu.matmul %3, %5, %cst_11 {dimension_numbers = #tpu.dot_dimension_numbers<[1], [1], [0], [0], [0, 0, 1, 0], [], []>} : vector<8x32xf32>, vector<16x32xf32>, vector<8x16xf32> -> vector<8x16xf32>
    %cst_12 = arith.constant dense<0xFF800000> : vector<8xf32>
    %9 = vector.multi_reduction <maximumf>, %8, %cst_12 [1] : vector<8x16xf32> to vector<8xf32>
    %10 = vector.shape_cast %9 : vector<8xf32> to vector<8x1xf32>
    %11 = vector.broadcast %10 : vector<8x1xf32> to vector<8x16xf32>
    %12 = arith.subf %8, %11 : vector<8x16xf32>
    %13 = math.exp %12 : vector<8x16xf32>
    %cst_13 = arith.constant dense<0.000000e+00> : vector<8xf32>
    %14 = vector.multi_reduction <add>, %13, %cst_13 [1] : vector<8x16xf32> to vector<8xf32>
    %15 = vector.shape_cast %14 : vector<8xf32> to vector<8x1xf32>
    %16 = tpu.reciprocal %15 : vector<8x1xf32> -> vector<8x1xf32>
    %17 = vector.broadcast %16 : vector<8x1xf32> to vector<8x16xf32>
    %18 = arith.mulf %13, %17 : vector<8x16xf32>
    %cst_14 = arith.constant dense<0.000000e+00> : vector<8x32xf32>
    %19 = tpu.matmul %18, %7, %cst_14 {dimension_numbers = #tpu.dot_dimension_numbers<[1], [0], [0], [1], [0, 0, 1, 1], [], []>} : vector<8x16xf32>, vector<16x32xf32>, vector<8x32xf32> -> vector<8x32xf32>
    %c0_15 = arith.constant 0 : index
    %c0_16 = arith.constant 0 : index
    %c0_17 = arith.constant 0 : index
    %c0_18 = arith.constant 0 : index
    %20 = vector.load %arg7[%c0_15, %c0_16, %c0_17, %c0_18] : memref<1x1x8x16xf32, #tpu.memory_space<vmem>>, vector<1x1x8x16xf32>
    %21 = vector.shape_cast %20 : vector<1x1x8x16xf32> to vector<8x16xf32>
    %22 = vector.shape_cast %18 : vector<8x16xf32> to vector<1x1x8x16xf32>
    tpu.vector_store %arg7[%c0_15, %c0_16, %c0_17, %c0_18], %22 {strides = array<i32>} : memref<1x1x8x16xf32, #tpu.memory_space<vmem>>, vector<1x1x8x16xf32>,
    %c0_19 = arith.constant 0 : index
    %c0_20 = arith.constant 0 : index
    %c0_21 = arith.constant 0 : index
    %c0_22 = arith.constant 0 : index
    %23 = vector.load %arg6[%c0_19, %c0_20, %c0_21, %c0_22] : memref<1x1x8x32xf32, #tpu.memory_space<vmem>>, vector<1x1x8x32xf32>
    %24 = vector.shape_cast %23 : vector<1x1x8x32xf32> to vector<8x32xf32>
    %25 = vector.shape_cast %19 : vector<8x32xf32> to vector<1x1x8x32xf32>
    tpu.vector_store %arg6[%c0_19, %c0_20, %c0_21, %c0_22], %25 {strides = array<i32>} : memref<1x1x8x32xf32, #tpu.memory_space<vmem>>, vector<1x1x8x32xf32>,
    return
  }
  func.func @transform_0(%arg0: i32, %arg1: i32, %arg2: i32) -> (i32, i32, i32, i32) {
    %c0_i32 = arith.constant 0 : i32
    %c0_i32_0 = arith.constant 0 : i32
    return %arg0, %arg1, %arg2, %c0_i32 : i32, i32, i32, i32
  }
  func.func @transform_1(%arg0: i32, %arg1: i32, %arg2: i32) -> (i32, i32, i32, i32) {
    %c0_i32 = arith.constant 0 : i32
    %c0_i32_0 = arith.constant 0 : i32
    %c0_i32_1 = arith.constant 0 : i32
    return %arg0, %arg1, %c0_i32, %c0_i32_0 : i32, i32, i32, i32
  }
  func.func @transform_2(%arg0: i32, %arg1: i32, %arg2: i32) -> (i32, i32, i32, i32) {
    %c0_i32 = arith.constant 0 : i32
    %c0_i32_0 = arith.constant 0 : i32
    %c0_i32_1 = arith.constant 0 : i32
    return %arg0, %arg1, %c0_i32, %c0_i32_0 : i32, i32, i32, i32
  }
  func.func @transform_3(%arg0: i32, %arg1: i32, %arg2: i32) -> (i32, i32, i32, i32) {
    %c0_i32 = arith.constant 0 : i32
    %c0_i32_0 = arith.constant 0 : i32
    return %arg0, %arg1, %arg2, %c0_i32 : i32, i32, i32, i32
  }
  func.func @transform_4(%arg0: i32, %arg1: i32, %arg2: i32) -> (i32, i32, i32, i32) {
    %c0_i32 = arith.constant 0 : i32
    %c0_i32_0 = arith.constant 0 : i32
    return %arg0, %arg1, %arg2, %c0_i32 : i32, i32, i32, i32
  }
}

</mosaic_0001>

<llo_original>
// kernel: tpu_custom_call.1
$region0: #{tpu_custom_call.1}
  #allocation0 [shape = 'u32[]', space=smem, size = 0x4, offset = 0x4, fixed_abs, tag = 'smem constant byte address 0x4 - core index']
  #allocation1 [shape = 'u32[144,128]{1,0:T(1,128)}', space=vmem, size = 0x12000, scoped, tag = 'internal scratch']
  %s0 = inlined_call_operand.hbm [shape: f32[2,4,32,32], index: 0, kind: input, shape index: {}]
  %s1 = inlined_call_operand.hbm [shape: f32[2,4,16,32], index: 1, kind: input, shape index: {}]
  %s2 = inlined_call_operand.hbm [shape: f32[2,4,16,32], index: 2, kind: input, shape index: {}]
  %s3 = inlined_call_operand.hbm [shape: f32[2,4,32,32], index: 3, kind: output, shape index: {0}]
  %s4 = inlined_call_operand.vmem [shape: f32[2,4,32,16], index: 4, kind: output, shape index: {1}]
  %5 = xla_tuple %s3, %s4
  %s6 = sld [smem:[#allocation0]]
  $region65: #{tpu_custom_call.1} parent=0
    _
  %s8 = ssub.s32 1, %s6
  %s9 = scalar_select 0, %s8, %s6
  $region1: #{tpu_custom_call.1} parent=0
    #allocation2 [shape = 'u8[8192]{0}', space=vmem, size = 0x2000, scoped, tag = 'input window, operand 0']
    #allocation3 [shape = 's32[2]{0}', space=sflag, size = 0x8, scoped, tag = 'scoped memory for tpu_custom_call.1']
    #allocation4 [shape = 's32[2]{0}', space=sflag, size = 0x8, scoped, tag = 'scoped memory for tpu_custom_call.1']
    #allocation5 [shape = 'u8[8192]{0}', space=vmem, size = 0x2000, scoped, tag = 'input window, operand 1, single buffered']
    #allocation6 [shape = 's32[1]{0}', space=sflag, size = 0x4, scoped, tag = 'scoped memory for tpu_custom_call.1']
    #allocation7 [shape = 'u8[8192]{0}', space=vmem, size = 0x2000, scoped, tag = 'input window, operand 2, single buffered']
    #allocation8 [shape = 'u8[8192]{0}', space=vmem, size = 0x2000, scoped, tag = 'output window, operand 0']
    %10 = vsyncpa [#allocation3], 0
    %s11 = scalar_lea.sflag [#allocation3], 1
    %12 = vsyncpa %s11, 0
    %13 = vsyncpa [#allocation6], 0
    %14 = vsyncpa [#allocation4], 0
    %s15 = scalar_lea.sflag [#allocation4], 1
    %16 = vsyncpa %s15, 0
    loop: start=0, step=1, limit=34
    $region2: #{tpu_custom_call.1} parent=1 // loop_pre_header
      _
    $region3: #{tpu_custom_call.1} parent=1 // loop_header
      %s18 = sphi 0, %s22
      %p19 = scmp.ge.s32.totalorder %s18, 34
      %s25 = sphi 0, %s44
      %s26 = sphi 0, %s40
      %s27 = sphi 0, %s36
      %s28 = sphi 0, %s25
      %s29 = sphi 0, %s26
      %s30 = sphi 0, %s27
      %s31 = sphi 0, %s28
      %s32 = sphi 0, %s29
      %s33 = sphi 0, %s30
      %s51 = sphi 0, %s53
      %s54 = sphi 0, %s51
      %s55 = sphi 0, %s54
      %s71 = sphi 0, %s55
      %s79 = sphi 0, %s81
      %s82 = sphi 0, %s79
      %s83 = sphi 0, %s82
      %s99 = sphi 0, %s83
      %s107 = sphi 0, %s109
      %s110 = sphi 0, %s107
      %s111 = sphi 0, %s110
      %s127 = sphi 0, %s111
      %s137 = sphi 0, %s139
      %s140 = sphi 0, %s137
      %s141 = sphi 0, %s140
      %s157 = sphi 0, %s141
      %s167 = sphi 0, %s169
      %s170 = sphi 0, %s167
      %s171 = sphi 0, %s170
      %s187 = sphi 0, %s171
    $region4: #{tpu_custom_call.1} parent=1 // loop_header_branch
      %21 = sbr.rel (%p19) target = $region8
    $region5: #{tpu_custom_call.1} parent=1 // loop_body
      %s23 = ssub.s32 %s18, 1
      %s24 = ssub.s32 %s18, 2
      %s34 = sadd.s32 1, %s27
      %p35 = scmp.ge.s32.totalorder %s34, 4
      %s36 = scalar_select %p35, 0, %s34
      %s37 = sadd.s32 1, %s26
      %s38 = scalar_select %p35, %s37, %s26
      %p39 = scmp.ge.s32.totalorder %s38, 4
      %s40 = scalar_select %p39, 0, %s38
      %s41 = sadd.s32 1, %s25
      %s42 = scalar_select %p39, %s41, %s25
      %p43 = scmp.ge.s32.totalorder %s42, 2
      %s44 = scalar_select %p43, 0, %s42
      %s45 = ssub.s32 %s25, %s44
      %s46 = ssub.s32 %s26, %s40
      %s47 = sor.u32 %s45, %s46
      %s48 = ssub.s32 %s27, %s36
      %s49 = sor.u32 %s47, %s48
      %p50 = scmp.eq.s32.totalorder %s49, 0
      %s52 = sadd.s32 %s51, 1
      %s53 = scalar_select %p50, %s51, %s52
      %p56 = pneg %p50
      %p57 = scmp.eq.s32.totalorder %s18, 31
      %p58 = por %p56, %p57
      %p59 = scmp.ne.s32.totalorder %s51, %s54
      %p60 = scmp.eq.s32.totalorder %s18, 0
      %p61 = por %p59, %p60
      %p62 = scmp.ne.s32.totalorder %s51, %s54
      %p63 = scmp.eq.s32.totalorder %s23, 31
      %p64 = por %p62, %p63
      %p65 = scmp.ne.s32.totalorder %s54, %s55
      %p66 = scmp.eq.s32.totalorder %s23, 0
      %p67 = por %p65, %p66
      %p68 = scmp.ne.s32.totalorder %s54, %s55
      %p69 = scmp.eq.s32.totalorder %s24, 31
      %p70 = por %p68, %p69
      %p72 = scmp.ne.s32.totalorder %s55, %s71
      %p73 = scmp.eq.s32.totalorder %s24, 0
      %p74 = por %p72, %p73
      %s75 = ssub.s32 %s25, %s44
      %s76 = ssub.s32 %s26, %s40
      %s77 = sor.u32 %s75, %s76
      %p78 = scmp.eq.s32.totalorder %s77, 0
      %s80 = sadd.s32 %s79, 1
      %s81 = scalar_select %p78, %s79, %s80
      %p84 = pneg %p78
      %p85 = scmp.eq.s32.totalorder %s18, 31
      %p86 = por %p84, %p85
      %p87 = scmp.ne.s32.totalorder %s79, %s82
      %p88 = scmp.eq.s32.totalorder %s18, 0
      %p89 = por %p87, %p88
      %p90 = scmp.ne.s32.totalorder %s79, %s82
      %p91 = scmp.eq.s32.totalorder %s23, 31
      %p92 = por %p90, %p91
      %p93 = scmp.ne.s32.totalorder %s82, %s83
      %p94 = scmp.eq.s32.totalorder %s23, 0
      %p95 = por %p93, %p94
      %p96 = scmp.ne.s32.totalorder %s82, %s83
      %p97 = scmp.eq.s32.totalorder %s24, 31
      %p98 = por %p96, %p97
      %p100 = scmp.ne.s32.totalorder %s83, %s99
      %p101 = scmp.eq.s32.totalorder %s24, 0
      %p102 = por %p100, %p101
      %s103 = ssub.s32 %s25, %s44
      %s104 = ssub.s32 %s26, %s40
      %s105 = sor.u32 %s103, %s104
      %p106 = scmp.eq.s32.totalorder %s105, 0
      %s108 = sadd.s32 %s107, 1
      %s109 = scalar_select %p106, %s107, %s108
      %p112 = pneg %p106
      %p113 = scmp.eq.s32.totalorder %s18, 31
      %p114 = por %p112, %p113
      %p115 = scmp.ne.s32.totalorder %s107, %s110
      %p116 = scmp.eq.s32.totalorder %s18, 0
      %p117 = por %p115, %p116
      %p118 = scmp.ne.s32.totalorder %s107, %s110
      %p119 = scmp.eq.s32.totalorder %s23, 31
      %p120 = por %p118, %p119
      %p121 = scmp.ne.s32.totalorder %s110, %s111
      %p122 = scmp.eq.s32.totalorder %s23, 0
      %p123 = por %p121, %p122
      %p124 = scmp.ne.s32.totalorder %s110, %s111
      %p125 = scmp.eq.s32.totalorder %s24, 31
      %p126 = por %p124, %p125
      %p128 = scmp.ne.s32.totalorder %s111, %s127
      %p129 = scmp.eq.s32.totalorder %s24, 0
      %p130 = por %p128, %p129
      %s131 = ssub.s32 %s25, %s44
      %s132 = ssub.s32 %s26, %s40
      %s133 = sor.u32 %s131, %s132
      %s134 = ssub.s32 %s27, %s36
      %s135 = sor.u32 %s133, %s134
      %p136 = scmp.eq.s32.totalorder %s135, 0
      %s138 = sadd.s32 %s137, 1
      %s139 = scalar_select %p136, %s137, %s138
      %p142 = pneg %p136
      %p143 = scmp.eq.s32.totalorder %s18, 31
      %p144 = por %p142, %p143
      %p145 = scmp.ne.s32.totalorder %s137, %s140
      %p146 = scmp.eq.s32.totalorder %s18, 0
      %p147 = por %p145, %p146
      %p148 = scmp.ne.s32.totalorder %s137, %s140
      %p149 = scmp.eq.s32.totalorder %s23, 31
      %p150 = por %p148, %p149
      %p151 = scmp.ne.s32.totalorder %s140, %s141
      %p152 = scmp.eq.s32.totalorder %s23, 0
      %p153 = por %p151, %p152
      %p154 = scmp.ne.s32.totalorder %s140, %s141
      %p155 = scmp.eq.s32.totalorder %s24, 31
      %p156 = por %p154, %p155
      %p158 = scmp.ne.s32.totalorder %s141, %s157
      %p159 = scmp.eq.s32.totalorder %s24, 0
      %p160 = por %p158, %p159
      %s161 = ssub.s32 %s25, %s44
      %s162 = ssub.s32 %s26, %s40
      %s163 = sor.u32 %s161, %s162
      %s164 = ssub.s32 %s27, %s36
      %s165 = sor.u32 %s163, %s164
      %p166 = scmp.eq.s32.totalorder %s165, 0
      %s168 = sadd.s32 %s167, 1
      %s169 = scalar_select %p166, %s167, %s168
      %p172 = pneg %p166
      %p173 = scmp.eq.s32.totalorder %s18, 31
      %p174 = por %p172, %p173
      %p175 = scmp.ne.s32.totalorder %s167, %s170
      %p176 = scmp.eq.s32.totalorder %s18, 0
      %p177 = por %p175, %p176
      %p178 = scmp.ne.s32.totalorder %s167, %s170
      %p179 = scmp.eq.s32.totalorder %s23, 31
      %p180 = por %p178, %p179
      %p181 = scmp.ne.s32.totalorder %s170, %s171
      %p182 = scmp.eq.s32.totalorder %s23, 0
      %p183 = por %p181, %p182
      %p184 = scmp.ne.s32.totalorder %s170, %s171
      %p185 = scmp.eq.s32.totalorder %s24, 31
      %p186 = por %p184, %p185
      %p188 = scmp.ne.s32.totalorder %s171, %s187
      %p189 = scmp.eq.s32.totalorder %s24, 0
      %p190 = por %p188, %p189
      %p191 = scmp.le.s32.totalorder 1, %s18
      %p192 = scmp.lt.s32.totalorder %s18, 33
      %p193 = pnand %p191, %p192
      %p194 = pneg %p193
      // Predicated region
      $region9: #{tpu_custom_call.1} parent=5 // pred_check
        _
      $region10: #{tpu_custom_call.1} parent=5 // pred_check_branch
        %196 = sbr.rel (%p193) target = $region12
      $region11: #{tpu_custom_call.1} parent=5 // pred_region
        %s197 = ssub.s32 %s18, 1
        // Predicated region
        $region13: #{tpu_custom_call.1} parent=11 // pred_check
          %p198 = pneg %p95
        $region14: #{tpu_custom_call.1} parent=11 // pred_check_branch
          %200 = sbr.rel (%p198) target = $region16
        $region15: #{tpu_custom_call.1} parent=11 // pred_region
          %s202 = ssub.s32 256, 256
          %203 = vsyncadd [#allocation6], %s202
          %s204 = smul.addr %s29, 2
          %s205 = smul.addr %s28, 8
          %s206 = sadd.s32 %s204, %s205
          %s207 = smul.addr %s206, 128
          %s208 = scalar_lea.hbm %s1, %s207
          %s209 = sshll.u32 [#allocation5], 4
          %s210 = int_to_ptr.vmem [resolvable:$true] %s209
          %215 = dma.hbm_to_vmem [thread:$0]  %s208, 256, %s210, [#allocation6], 128, 128, 8
        $region16: #{tpu_custom_call.1} parent=11 // pred_fallthru
          _
        // Predicated region
        $region17: #{tpu_custom_call.1} parent=11 // pred_check
          %p216 = pneg %p123
        $region18: #{tpu_custom_call.1} parent=11 // pred_check_branch
          %218 = sbr.rel (%p216) target = $region20
        $region19: #{tpu_custom_call.1} parent=11 // pred_region
          %s220 = ssub.s32 256, 256
          %221 = vsyncadd [#allocation6], %s220
          %s222 = smul.addr %s29, 2
          %s223 = smul.addr %s28, 8
          %s224 = sadd.s32 %s222, %s223
          %s225 = smul.addr %s224, 128
          %s226 = scalar_lea.hbm %s2, %s225
          %s227 = sshll.u32 [#allocation7], 4
          %s228 = int_to_ptr.vmem [resolvable:$true] %s227
          %233 = dma.hbm_to_vmem [thread:$0]  %s226, 256, %s228, [#allocation6], 128, 128, 8
        $region20: #{tpu_custom_call.1} parent=11 // pred_fallthru
          _
      $region12: #{tpu_custom_call.1} parent=5 // pred_fallthru
        _
      %p234 = scmp.lt.s32.totalorder %s18, 32
      // Predicated region
      $region21: #{tpu_custom_call.1} parent=5 // pred_check
        %p235 = pneg %p234
      $region22: #{tpu_custom_call.1} parent=5 // pred_check_branch
        %237 = sbr.rel (%p235) target = $region24
      $region23: #{tpu_custom_call.1} parent=5 // pred_region
        // Predicated region
        $region25: #{tpu_custom_call.1} parent=23 // pred_check
          %p238 = pneg %p61
        $region26: #{tpu_custom_call.1} parent=23 // pred_check_branch
          %240 = sbr.rel (%p238) target = $region28
        $region27: #{tpu_custom_call.1} parent=23 // pred_region
          %s241 = sand.u32 %s51, 1
          %s242 = scalar_lea.sflag [#allocation3], %s241
          %s243 = sand.u32 %s51, 1
          %s244 = smul.addr %s243, 8
          %s245 = scalar_lea.vmem [#allocation2], %s244
          %s247 = ssub.s32 128, 128
          %248 = vsyncadd %s242, %s247
          %s249 = smul.addr %s26, 4
          %s250 = sadd.s32 %s27, %s249
          %s251 = smul.addr %s25, 16
          %s252 = sadd.s32 %s250, %s251
          %s253 = smul.addr %s252, 128
          %s254 = scalar_lea.hbm %s0, %s253
          %s256 = sshll.u32 %s245, 4
          %s257 = int_to_ptr.vmem [resolvable:$true] %s256
          %259 = dma.hbm_to_vmem [thread:$0]  %s254, 128, %s257, %s242
        $region28: #{tpu_custom_call.1} parent=23 // pred_fallthru
          _
      $region24: #{tpu_custom_call.1} parent=5 // pred_fallthru
        _
      %p260 = scmp.le.s32.totalorder 1, %s18
      %p261 = scmp.lt.s32.totalorder %s18, 33
      %p262 = pnand %p260, %p261
      %p263 = pneg %p262
      // Predicated region
      $region29: #{tpu_custom_call.1} parent=5 // pred_check
        _
      $region30: #{tpu_custom_call.1} parent=5 // pred_check_branch
        %265 = sbr.rel (%p262) target = $region32
      $region31: #{tpu_custom_call.1} parent=5 // pred_region
        %s266 = ssub.s32 %s18, 1
        %s267 = sand.u32 %s54, 1
        %s268 = scalar_lea.sflag [#allocation3], %s267
        %s269 = sand.u32 %s54, 1
        %s270 = smul.addr %s269, 8
        %s271 = scalar_lea.vmem [#allocation2], %s270
        // Predicated region
        $region33: #{tpu_custom_call.1} parent=31 // pred_check
          %p272 = pneg %p67
        $region34: #{tpu_custom_call.1} parent=31 // pred_check_branch
          %274 = sbr.rel (%p272) target = $region36
        $region35: #{tpu_custom_call.1} parent=31 // pred_region
          %275 = dma.done %s268, 128
        $region36: #{tpu_custom_call.1} parent=31 // pred_fallthru
          _
        // Predicated region
        $region37: #{tpu_custom_call.1} parent=31 // pred_check
          %p276 = pneg %p95
        $region38: #{tpu_custom_call.1} parent=31 // pred_check_branch
          %278 = sbr.rel (%p276) target = $region40
        $region39: #{tpu_custom_call.1} parent=31 // pred_region
          %279 = dma.done [#allocation6], 256
        $region40: #{tpu_custom_call.1} parent=31 // pred_fallthru
          _
        // Predicated region
        $region41: #{tpu_custom_call.1} parent=31 // pred_check
          %p280 = pneg %p123
        $region42: #{tpu_custom_call.1} parent=31 // pred_check_branch
          %282 = sbr.rel (%p280) target = $region44
        $region43: #{tpu_custom_call.1} parent=31 // pred_region
          %283 = dma.done [#allocation6], 256
        $region44: #{tpu_custom_call.1} parent=31 // pred_fallthru
          _
        %s284 = sand.u32 %s54, 1
        %s285 = scalar_lea.sflag [#allocation3], %s284
        %s286 = sand.u32 %s54, 1
        %s287 = smul.addr %s286, 8
        %s288 = scalar_lea.vmem [#allocation2], %s287
        %p289 = pneg %p67
        %p290 = pneg %p64
        %p291 = pneg %p95
        %p292 = pneg %p92
        %p293 = pneg %p123
        %p294 = pneg %p120
        %p295 = pneg %p153
        %p296 = pneg %p150
        %s297 = sand.u32 %s140, 1
        %s298 = scalar_lea.sflag [#allocation4], %s297
        %s299 = sand.u32 %s140, 1
        %s300 = smul.addr %s299, 8
        %s301 = scalar_lea.vmem [#allocation8], %s300
        %p302 = pneg %p183
        %p303 = pneg %p180
        %p304 = scmp.lt.s32.totalorder %s28, 1
        %s305 = scalar_select %p304, %s28, 1
        %p306 = scmp.lt.s32.totalorder %s29, 3
        %s307 = scalar_select %p306, %s29, 3
        %p308 = scmp.lt.s32.totalorder %s30, 3
        %s309 = scalar_select %p308, %s30, 3
        %s310 = smul.addr %s307, 4
        %s311 = sadd.s32 %s309, %s310
        %s312 = smul.addr %s305, 16
        %s313 = sadd.s32 %s311, %s312
        %s314 = smul.addr %s313, 8
        %s315 = scalar_lea.vmem %s4, %s314
        %p316 = scmp.lt.s32.totalorder %s28, 1
        %s317 = scalar_select %p316, %s28, 1
        %p318 = scmp.lt.s32.totalorder %s29, 3
        %s319 = scalar_select %p318, %s29, 3
        %p320 = scmp.lt.s32.totalorder %s30, 3
        %s321 = scalar_select %p320, %s30, 3
        %s322 = smul.addr %s319, 4
        %s323 = sadd.s32 %s321, %s322
        %s324 = smul.addr %s317, 16
        %s325 = sadd.s32 %s323, %s324
        %s326 = smul.addr %s325, 8
        %s327 = scalar_lea.vmem %s4, %s326
        %v328 = vld [vmem:[%s271] sm:$0xff]
        %v329 = vmul.f32 %v328, 0.17677669
        %v330 = vld [vmem:[#allocation5] sm:$0xff]
        %v331 = vld [vmem:[#allocation5 + $0x8] sm:$0xff]
        %v332 = vld [vmem:[#allocation7] sm:$0xff]
        %v333 = vld [vmem:[#allocation7 + $0x8] sm:$0xff]
        %vm334 = vcmask 261120
        %v336 = vsel %vm334, %v329, 0
        %v339 = vsel %vm334, %v330, 0
        %v342 = vsel %vm334, %v331, 0
        %344 = vmatprep.subr.mxu0 0.0
        %345 = vmatpush1.xpose.msra.mxu0 0.0
        %346 = vmatprep.subr.mxu0 0.0
        %347 = vmatpush1.xpose.msra.mxu0 0.0
        %348 = vmatprep.subr.mxu0 0.0
        %349 = vmatpush1.xpose.msra.mxu0 0.0
        %350 = vmatprep.subr.mxu0 0.0
        %351 = vmatpush1.xpose.msra.mxu0 0.0
        %352 = vmatprep.subr.mxu0 0.0
        %353 = vmatpush1.xpose.msra.mxu0 0.0
        %354 = vmatprep.subr.mxu0 0.0
        %355 = vmatpush1.xpose.msra.mxu0 0.0
        %356 = vmatprep.subr.mxu0 0.0
        %357 = vmatpush1.xpose.msra.mxu0 0.0
        %358 = vmatprep.subr.mxu0 0.0
        %359 = vmatpush1.xpose.msra.mxu0 0.0
        %360 = vmatprep.subr.mxu0 0.0
        %361 = vmatpush1.xpose.msra.mxu0 0.0
        %362 = vmatprep.subr.mxu0 0.0
        %363 = vmatpush1.xpose.msra.mxu0 0.0
        %364 = vmatprep.subr.mxu0 0.0
        %365 = vmatpush1.xpose.msra.mxu0 0.0
        %366 = vmatprep.subr.mxu0 0.0
        %367 = vmatpush1.xpose.msra.mxu0 0.0
        %368 = vmatprep.subr.mxu0 0.0
        %369 = vmatpush1.xpose.msra.mxu0 0.0
        %370 = vmatprep.subr.mxu0 0.0
        %371 = vmatpush1.xpose.msra.mxu0 0.0
        %372 = vmatprep.subr.mxu0 0.0
        %373 = vmatpush1.xpose.msra.mxu0 %v342
        %374 = vmatprep.subr.mxu0 0.0
        %375 = vmatpush1.xpose.msra.mxu0 %v339
        %376 = vmatprep.subr.mxu0 0.0
        %377 = vmatpush2.xpose.msra.mxu0 0.0
        %378 = vmatprep.subr.mxu0 0.0
        %379 = vmatpush2.xpose.msra.mxu0 0.0
        %380 = vmatprep.subr.mxu0 0.0
        %381 = vmatpush2.xpose.msra.mxu0 0.0
        %382 = vmatprep.subr.mxu0 0.0
        %383 = vmatpush2.xpose.msra.mxu0 0.0
        %384 = vmatprep.subr.mxu0 0.0
        %385 = vmatpush2.xpose.msra.mxu0 0.0
        %386 = vmatprep.subr.mxu0 0.0
        %387 = vmatpush2.xpose.msra.mxu0 0.0
        %388 = vmatprep.subr.mxu0 0.0
        %389 = vmatpush2.xpose.msra.mxu0 0.0
        %390 = vmatprep.subr.mxu0 0.0
        %391 = vmatpush2.xpose.msra.mxu0 0.0
        %392 = vmatprep.subr.mxu0 0.0
        %393 = vmatpush2.xpose.msra.mxu0 0.0
        %394 = vmatprep.subr.mxu0 0.0
        %395 = vmatpush2.xpose.msra.mxu0 0.0
        %396 = vmatprep.subr.mxu0 0.0
        %397 = vmatpush2.xpose.msra.mxu0 0.0
        %398 = vmatprep.subr.mxu0 0.0
        %399 = vmatpush2.xpose.msra.mxu0 0.0
        %400 = vmatprep.subr.mxu0 0.0
        %401 = vmatpush2.xpose.msra.mxu0 0.0
        %402 = vmatprep.subr.mxu0 0.0
        %403 = vmatpush2.xpose.msra.mxu0 0.0
        %404 = vmatprep.subr.mxu0 0.0
        %405 = vmatpush2.xpose.msra.mxu0 0.0
        %406 = vmatprep.subr.mxu0 0.0
        %407 = vmatpush2.xpose.msra.mxu0 0.0
        %408 = vmatprep.mubr.f32.mxu0 0.0
        %409 = vmatmul.mubr.f32.gmra.mxu0 %v336
        %v410 = vpop.f32.mrf.mxu0
        %v411 = vadd.f32 0.0, %v410
        %v412 = vpop.f32.mrf.mxu0
        %413 = vdwg.mxu0
        %vm414 = vcmask 130048
        %v415 = vsel %vm414, %v411, -inf
        %416 = vmax.xlane.f32.xlu0 %v415
        %v417 = vpop.xlane.xlu0 %416
        %v418 = vsub.f32 %v411, %v417
        %v419 = vmul.f32 %v418, 1.442695
        %v420 = vpow.pop %v419
        %v421 = vsel %vm414, %v420, 0.0
        %422 = vadd.xlane.f32.xlu0 %v421
        %v423 = vpop.xlane.xlu0 %422
        %v424 = vrcp.pop %v423
        %v425 = vmul.f32 %v420, %v424
        %v427 = vsel %vm414, %v425, 0
        %429 = vmatprep.subr.mxu0 0.0
        %430 = vmatpush1.msra.mxu0 0.0
        %431 = vmatprep.subr.mxu0 0.0
        %432 = vmatpush1.msra.mxu0 0.0
        %433 = vmatprep.subr.mxu0 0.0
        %434 = vmatpush1.msra.mxu0 0.0
        %435 = vmatprep.subr.mxu0 0.0
        %436 = vmatpush1.msra.mxu0 0.0
        %437 = vmatprep.subr.mxu0 0.0
        %438 = vmatpush1.msra.mxu0 0.0
        %439 = vmatprep.subr.mxu0 0.0
        %440 = vmatpush1.msra.mxu0 0.0
        %441 = vmatprep.subr.mxu0 0.0
        %442 = vmatpush1.msra.mxu0 0.0
        %443 = vmatprep.subr.mxu0 0.0
        %444 = vmatpush1.msra.mxu0 0.0
        %445 = vmatprep.subr.mxu0 0.0
        %446 = vmatpush1.msra.mxu0 0.0
        %447 = vmatprep.subr.mxu0 0.0
        %448 = vmatpush1.msra.mxu0 0.0
        %449 = vmatprep.subr.mxu0 0.0
        %450 = vmatpush1.msra.mxu0 0.0
        %451 = vmatprep.subr.mxu0 0.0
        %452 = vmatpush1.msra.mxu0 0.0
        %453 = vmatprep.subr.mxu0 0.0
        %454 = vmatpush1.msra.mxu0 0.0
        %455 = vmatprep.subr.mxu0 0.0
        %456 = vmatpush1.msra.mxu0 0.0
        %457 = vmatprep.subr.mxu0 0.0
        %458 = vmatpush1.msra.mxu0 %v333
        %459 = vmatprep.subr.mxu0 0.0
        %460 = vmatpush1.msra.mxu0 %v332
        %461 = vmatprep.subr.mxu0 0.0
        %462 = vmatpush2.msra.mxu0 0.0
        %463 = vmatprep.subr.mxu0 0.0
        %464 = vmatpush2.msra.mxu0 0.0
        %465 = vmatprep.subr.mxu0 0.0
        %466 = vmatpush2.msra.mxu0 0.0
        %467 = vmatprep.subr.mxu0 0.0
        %468 = vmatpush2.msra.mxu0 0.0
        %469 = vmatprep.subr.mxu0 0.0
        %470 = vmatpush2.msra.mxu0 0.0
        %471 = vmatprep.subr.mxu0 0.0
        %472 = vmatpush2.msra.mxu0 0.0
        %473 = vmatprep.subr.mxu0 0.0
        %474 = vmatpush2.msra.mxu0 0.0
        %475 = vmatprep.subr.mxu0 0.0
        %476 = vmatpush2.msra.mxu0 0.0
        %477 = vmatprep.subr.mxu0 0.0
        %478 = vmatpush2.msra.mxu0 0.0
        %479 = vmatprep.subr.mxu0 0.0
        %480 = vmatpush2.msra.mxu0 0.0
        %481 = vmatprep.subr.mxu0 0.0
        %482 = vmatpush2.msra.mxu0 0.0
        %483 = vmatprep.subr.mxu0 0.0
        %484 = vmatpush2.msra.mxu0 0.0
        %485 = vmatprep.subr.mxu0 0.0
        %486 = vmatpush2.msra.mxu0 0.0
        %487 = vmatprep.subr.mxu0 0.0
        %488 = vmatpush2.msra.mxu0 0.0
        %489 = vmatprep.subr.mxu0 0.0
        %490 = vmatpush2.msra.mxu0 0.0
        %491 = vmatprep.subr.mxu0 0.0
        %492 = vmatpush2.msra.mxu0 0.0
        %493 = vmatprep.mubr.f32.mxu0 0.0
        %494 = vmatmul.mubr.f32.gmra.mxu0 %v427
        %v495 = vpop.f32.mrf.mxu0
        %v496 = vadd.f32 0.0, %v495
        %v497 = vpop.f32.mrf.mxu0
        %498 = vdwg.mxu0
        %499 = vst.msk [vmem:[%s327] sm:$0xff] %vm414, %v425
        %500 = vst.msk [vmem:[%s301] sm:$0xff] %vm334, %v496
        %s501 = sand.u32 %s140, 1
        %s502 = scalar_lea.sflag [#allocation4], %s501
        %s503 = sand.u32 %s140, 1
        %s504 = smul.addr %s503, 8
        %s505 = scalar_lea.vmem [#allocation8], %s504
        %p506 = scmp.lt.s32.totalorder %s28, 1
        %s507 = scalar_select %p506, %s28, 1
        %p508 = scmp.lt.s32.totalorder %s29, 3
        %s509 = scalar_select %p508, %s29, 3
        %p510 = scmp.lt.s32.totalorder %s30, 3
        %s511 = scalar_select %p510, %s30, 3
        %s512 = smul.addr %s509, 4
        %s513 = sadd.s32 %s511, %s512
        %s514 = smul.addr %s507, 16
        %s515 = sadd.s32 %s513, %s514
        %s516 = smul.addr %s515, 8
        %s517 = scalar_lea.vmem %s4, %s516
        // Predicated region
        $region45: #{tpu_custom_call.1} parent=31 // pred_check
          %p518 = pneg %p150
        $region46: #{tpu_custom_call.1} parent=31 // pred_check_branch
          %520 = sbr.rel (%p518) target = $region48
        $region47: #{tpu_custom_call.1} parent=31 // pred_region
          %s522 = ssub.s32 128, 128
          %523 = vsyncadd %s502, %s522
          %s524 = smul.addr %s29, 4
          %s525 = sadd.s32 %s30, %s524
          %s526 = smul.addr %s28, 16
          %s527 = sadd.s32 %s525, %s526
          %s528 = smul.addr %s527, 128
          %s529 = scalar_lea.hbm %s3, %s528
          %s531 = sshll.u32 %s505, 4
          %s532 = int_to_ptr.vmem [resolvable:$true] %s531
          %534 = dma.vmem_to_hbm [thread:$0]  %s532, 128, %s529, %s502
        $region48: #{tpu_custom_call.1} parent=31 // pred_fallthru
          _
        // Predicated region
        $region49: #{tpu_custom_call.1} parent=31 // pred_check
          %p535 = pneg %p180
        $region50: #{tpu_custom_call.1} parent=31 // pred_check_branch
          %537 = sbr.rel (%p535) target = $region52
        $region51: #{tpu_custom_call.1} parent=31 // pred_region
          _
        $region52: #{tpu_custom_call.1} parent=31 // pred_fallthru
          _
      $region32: #{tpu_custom_call.1} parent=5 // pred_fallthru
        _
      %p538 = scmp.le.s32.totalorder 2, %s18
      // Predicated region
      $region53: #{tpu_custom_call.1} parent=5 // pred_check
        %p539 = pneg %p538
      $region54: #{tpu_custom_call.1} parent=5 // pred_check_branch
        %541 = sbr.rel (%p539) target = $region56
      $region55: #{tpu_custom_call.1} parent=5 // pred_region
        %s542 = ssub.s32 %s18, 2
        // Predicated region
        $region57: #{tpu_custom_call.1} parent=55 // pred_check
          %p543 = pneg %p156
        $region58: #{tpu_custom_call.1} parent=55 // pred_check_branch
          %545 = sbr.rel (%p543) target = $region60
        $region59: #{tpu_custom_call.1} parent=55 // pred_region
          %s546 = sand.u32 %s141, 1
          %s547 = scalar_lea.sflag [#allocation4], %s546
          %s548 = sand.u32 %s141, 1
          %s549 = smul.addr %s548, 8
          %s550 = scalar_lea.vmem [#allocation8], %s549
          %551 = dma.done %s547, 128
        $region60: #{tpu_custom_call.1} parent=55 // pred_fallthru
          _
        // Predicated region
        $region61: #{tpu_custom_call.1} parent=55 // pred_check
          %p552 = pneg %p186
        $region62: #{tpu_custom_call.1} parent=55 // pred_check_branch
          %554 = sbr.rel (%p552) target = $region64
        $region63: #{tpu_custom_call.1} parent=55 // pred_region
          %p555 = scmp.lt.s32.totalorder %s31, 1
          %s556 = scalar_select %p555, %s31, 1
          %p557 = scmp.lt.s32.totalorder %s32, 3
          %s558 = scalar_select %p557, %s32, 3
          %p559 = scmp.lt.s32.totalorder %s33, 3
          %s560 = scalar_select %p559, %s33, 3
          %s561 = smul.addr %s558, 4
          %s562 = sadd.s32 %s560, %s561
          %s563 = smul.addr %s556, 16
          %s564 = sadd.s32 %s562, %s563
          %s565 = smul.addr %s564, 8
          %s566 = scalar_lea.vmem %s4, %s565
        $region64: #{tpu_custom_call.1} parent=55 // pred_fallthru
          _
      $region56: #{tpu_custom_call.1} parent=5 // pred_fallthru
        _
    $region6: #{tpu_custom_call.1} parent=1 // loop_footer
      %s22 = sadd.s32 1, %s18
    $region7: #{tpu_custom_call.1} parent=1 // loop_footer_branch
      %17 = sbr.rel target = $region3
    $region8: #{tpu_custom_call.1} parent=1 // loop_exit
      _
    %567 = vsyncpa [#allocation3], 1
    %s568 = scalar_lea.sflag [#allocation3], 1
    %569 = vsyncpa %s568, 1
    %570 = vsyncpa [#allocation6], 1
    %571 = vsyncpa [#allocation4], 1
    %s572 = scalar_lea.sflag [#allocation4], 1
    %573 = vsyncpa %s572, 1

// kernel: tpu_custom_call.1
$region0: #{tpu_custom_call.1}
  #allocation0 [shape = 'u32[]', space=smem, size = 0x4, offset = 0x4, fixed_abs, tag = 'smem constant byte address 0x4 - core index']
  #allocation1 [shape = 'u32[144,128]{1,0:T(1,128)}', space=vmem, size = 0x12000, scoped, tag = 'internal scratch']
  %s0 = inlined_call_operand.hbm [shape: f32[2,4,32,32], index: 0, kind: input, shape index: {}]
  %s1 = inlined_call_operand.hbm [shape: f32[2,4,16,32], index: 1, kind: input, shape index: {}]
  %s2 = inlined_call_operand.hbm [shape: f32[2,4,16,32], index: 2, kind: input, shape index: {}]
  %s3 = inlined_call_operand.hbm [shape: f32[2,4,32,32], index: 3, kind: output, shape index: {0}]
  %s4 = inlined_call_operand.vmem [shape: f32[2,4,32,16], index: 4, kind: output, shape index: {1}]
  %5 = xla_tuple %s3, %s4
  %s6 = sld [smem:[#allocation0]]
  $region65: #{tpu_custom_call.1} parent=0
    _
  %s8 = ssub.s32 1, %s6
  %s9 = scalar_select 0, %s8, %s6
  $region1: #{tpu_custom_call.1} parent=0
    #allocation2 [shape = 'u8[8192]{0}', space=vmem, size = 0x2000, scoped, tag = 'input window, operand 0']
    #allocation3 [shape = 's32[2]{0}', space=sflag, size = 0x8, scoped, tag = 'scoped memory for tpu_custom_call.1']
    #allocation4 [shape = 's32[2]{0}', space=sflag, size = 0x8, scoped, tag = 'scoped memory for tpu_custom_call.1']
    #allocation5 [shape = 'u8[16384]{0}', space=vmem, size = 0x4000, scoped, tag = 'input window, operand 1']
    #allocation6 [shape = 's32[2]{0}', space=sflag, size = 0x8, scoped, tag = 'scoped memory for tpu_custom_call.1']
    #allocation7 [shape = 'u8[16384]{0}', space=vmem, size = 0x4000, scoped, tag = 'input window, operand 2']
    #allocation8 [shape = 'u8[8192]{0}', space=vmem, size = 0x2000, scoped, tag = 'output window, operand 0']
    %10 = vsyncpa [#allocation3], 0
    %s11 = scalar_lea.sflag [#allocation3], 1
    %12 = vsyncpa %s11, 0
    %13 = vsyncpa [#allocation6], 0
    %s14 = scalar_lea.sflag [#allocation6], 1
    %15 = vsyncpa %s14, 0
    %16 = vsyncpa [#allocation4], 0
    %s17 = scalar_lea.sflag [#allocation4], 1
    %18 = vsyncpa %s17, 0
    loop: start=0, step=1, limit=34
    $region2: #{tpu_custom_call.1} parent=1 // loop_pre_header
      _
    $region3: #{tpu_custom_call.1} parent=1 // loop_header
      %s20 = sphi 0, %s24
      %p21 = scmp.ge.s32.totalorder %s20, 34
      %s27 = sphi 0, %s46
      %s28 = sphi 0, %s42
      %s29 = sphi 0, %s38
      %s30 = sphi 0, %s27
      %s31 = sphi 0, %s28
      %s32 = sphi 0, %s29
      %s33 = sphi 0, %s30
      %s34 = sphi 0, %s31
      %s35 = sphi 0, %s32
      %s53 = sphi 0, %s55
      %s56 = sphi 0, %s53
      %s57 = sphi 0, %s56
      %s73 = sphi 0, %s57
      %s81 = sphi 0, %s83
      %s84 = sphi 0, %s81
      %s85 = sphi 0, %s84
      %s101 = sphi 0, %s85
      %s109 = sphi 0, %s111
      %s112 = sphi 0, %s109
      %s113 = sphi 0, %s112
      %s129 = sphi 0, %s113
      %s139 = sphi 0, %s141
      %s142 = sphi 0, %s139
      %s143 = sphi 0, %s142
      %s159 = sphi 0, %s143
      %s169 = sphi 0, %s171
      %s172 = sphi 0, %s169
      %s173 = sphi 0, %s172
      %s189 = sphi 0, %s173
    $region4: #{tpu_custom_call.1} parent=1 // loop_header_branch
      %23 = sbr.rel (%p21) target = $region8
    $region5: #{tpu_custom_call.1} parent=1 // loop_body
      %s25 = ssub.s32 %s20, 1
      %s26 = ssub.s32 %s20, 2
      %s36 = sadd.s32 1, %s29
      %p37 = scmp.ge.s32.totalorder %s36, 4
      %s38 = scalar_select %p37, 0, %s36
      %s39 = sadd.s32 1, %s28
      %s40 = scalar_select %p37, %s39, %s28
      %p41 = scmp.ge.s32.totalorder %s40, 4
      %s42 = scalar_select %p41, 0, %s40
      %s43 = sadd.s32 1, %s27
      %s44 = scalar_select %p41, %s43, %s27
      %p45 = scmp.ge.s32.totalorder %s44, 2
      %s46 = scalar_select %p45, 0, %s44
      %s47 = ssub.s32 %s27, %s46
      %s48 = ssub.s32 %s28, %s42
      %s49 = sor.u32 %s47, %s48
      %s50 = ssub.s32 %s29, %s38
      %s51 = sor.u32 %s49, %s50
      %p52 = scmp.eq.s32.totalorder %s51, 0
      %s54 = sadd.s32 %s53, 1
      %s55 = scalar_select %p52, %s53, %s54
      %p58 = pneg %p52
      %p59 = scmp.eq.s32.totalorder %s20, 31
      %p60 = por %p58, %p59
      %p61 = scmp.ne.s32.totalorder %s53, %s56
      %p62 = scmp.eq.s32.totalorder %s20, 0
      %p63 = por %p61, %p62
      %p64 = scmp.ne.s32.totalorder %s53, %s56
      %p65 = scmp.eq.s32.totalorder %s25, 31
      %p66 = por %p64, %p65
      %p67 = scmp.ne.s32.totalorder %s56, %s57
      %p68 = scmp.eq.s32.totalorder %s25, 0
      %p69 = por %p67, %p68
      %p70 = scmp.ne.s32.totalorder %s56, %s57
      %p71 = scmp.eq.s32.totalorder %s26, 31
      %p72 = por %p70, %p71
      %p74 = scmp.ne.s32.totalorder %s57, %s73
      %p75 = scmp.eq.s32.totalorder %s26, 0
      %p76 = por %p74, %p75
      %s77 = ssub.s32 %s27, %s46
      %s78 = ssub.s32 %s28, %s42
      %s79 = sor.u32 %s77, %s78
      %p80 = scmp.eq.s32.totalorder %s79, 0
      %s82 = sadd.s32 %s81, 1
      %s83 = scalar_select %p80, %s81, %s82
      %p86 = pneg %p80
      %p87 = scmp.eq.s32.totalorder %s20, 31
      %p88 = por %p86, %p87
      %p89 = scmp.ne.s32.totalorder %s81, %s84
      %p90 = scmp.eq.s32.totalorder %s20, 0
      %p91 = por %p89, %p90
      %p92 = scmp.ne.s32.totalorder %s81, %s84
      %p93 = scmp.eq.s32.totalorder %s25, 31
      %p94 = por %p92, %p93
      %p95 = scmp.ne.s32.totalorder %s84, %s85
      %p96 = scmp.eq.s32.totalorder %s25, 0
      %p97 = por %p95, %p96
      %p98 = scmp.ne.s32.totalorder %s84, %s85
      %p99 = scmp.eq.s32.totalorder %s26, 31
      %p100 = por %p98, %p99
      %p102 = scmp.ne.s32.totalorder %s85, %s101
      %p103 = scmp.eq.s32.totalorder %s26, 0
      %p104 = por %p102, %p103
      %s105 = ssub.s32 %s27, %s46
      %s106 = ssub.s32 %s28, %s42
      %s107 = sor.u32 %s105, %s106
      %p108 = scmp.eq.s32.totalorder %s107, 0
      %s110 = sadd.s32 %s109, 1
      %s111 = scalar_select %p108, %s109, %s110
      %p114 = pneg %p108
      %p115 = scmp.eq.s32.totalorder %s20, 31
      %p116 = por %p114, %p115
      %p117 = scmp.ne.s32.totalorder %s109, %s112
      %p118 = scmp.eq.s32.totalorder %s20, 0
      %p119 = por %p117, %p118
      %p120 = scmp.ne.s32.totalorder %s109, %s112
      %p121 = scmp.eq.s32.totalorder %s25, 31
      %p122 = por %p120, %p121
      %p123 = scmp.ne.s32.totalorder %s112, %s113
      %p124 = scmp.eq.s32.totalorder %s25, 0
      %p125 = por %p123, %p124
      %p126 = scmp.ne.s32.totalorder %s112, %s113
      %p127 = scmp.eq.s32.totalorder %s26, 31
      %p128 = por %p126, %p127
      %p130 = scmp.ne.s32.totalorder %s113, %s129
      %p131 = scmp.eq.s32.totalorder %s26, 0
      %p132 = por %p130, %p131
      %s133 = ssub.s32 %s27, %s46
      %s134 = ssub.s32 %s28, %s42
      %s135 = sor.u32 %s133, %s134
      %s136 = ssub.s32 %s29, %s38
      %s137 = sor.u32 %s135, %s136
      %p138 = scmp.eq.s32.totalorder %s137, 0
      %s140 = sadd.s32 %s139, 1
      %s141 = scalar_select %p138, %s139, %s140
      %p144 = pneg %p138
      %p145 = scmp.eq.s32.totalorder %s20, 31
      %p146 = por %p144, %p145
      %p147 = scmp.ne.s32.totalorder %s139, %s142
      %p148 = scmp.eq.s32.totalorder %s20, 0
      %p149 = por %p147, %p148
      %p150 = scmp.ne.s32.totalorder %s139, %s142
      %p151 = scmp.eq.s32.totalorder %s25, 31
      %p152 = por %p150, %p151
      %p153 = scmp.ne.s32.totalorder %s142, %s143
      %p154 = scmp.eq.s32.totalorder %s25, 0
      %p155 = por %p153, %p154
      %p156 = scmp.ne.s32.totalorder %s142, %s143
      %p157 = scmp.eq.s32.totalorder %s26, 31
      %p158 = por %p156, %p157
      %p160 = scmp.ne.s32.totalorder %s143, %s159
      %p161 = scmp.eq.s32.totalorder %s26, 0
      %p162 = por %p160, %p161
      %s163 = ssub.s32 %s27, %s46
      %s164 = ssub.s32 %s28, %s42
      %s165 = sor.u32 %s163, %s164
      %s166 = ssub.s32 %s29, %s38
      %s167 = sor.u32 %s165, %s166
      %p168 = scmp.eq.s32.totalorder %s167, 0
      %s170 = sadd.s32 %s169, 1
      %s171 = scalar_select %p168, %s169, %s170
      %p174 = pneg %p168
      %p175 = scmp.eq.s32.totalorder %s20, 31
      %p176 = por %p174, %p175
      %p177 = scmp.ne.s32.totalorder %s169, %s172
      %p178 = scmp.eq.s32.totalorder %s20, 0
      %p179 = por %p177, %p178
      %p180 = scmp.ne.s32.totalorder %s169, %s172
      %p181 = scmp.eq.s32.totalorder %s25, 31
      %p182 = por %p180, %p181
      %p183 = scmp.ne.s32.totalorder %s172, %s173
      %p184 = scmp.eq.s32.totalorder %s25, 0
      %p185 = por %p183, %p184
      %p186 = scmp.ne.s32.totalorder %s172, %s173
      %p187 = scmp.eq.s32.totalorder %s26, 31
      %p188 = por %p186, %p187
      %p190 = scmp.ne.s32.totalorder %s173, %s189
      %p191 = scmp.eq.s32.totalorder %s26, 0
      %p192 = por %p190, %p191
      %p193 = scmp.le.s32.totalorder 1, %s20
      %p194 = scmp.lt.s32.totalorder %s20, 33
      %p195 = pnand %p193, %p194
      %p196 = pneg %p195
      // Predicated region
      $region9: #{tpu_custom_call.1} parent=5 // pred_check
        _
      $region10: #{tpu_custom_call.1} parent=5 // pred_check_branch
        %198 = sbr.rel (%p195) target = $region12
      $region11: #{tpu_custom_call.1} parent=5 // pred_region
        %s199 = ssub.s32 %s20, 1
      $region12: #{tpu_custom_call.1} parent=5 // pred_fallthru
        _
      %p200 = scmp.lt.s32.totalorder %s20, 32
      // Predicated region
      $region13: #{tpu_custom_call.1} parent=5 // pred_check
        %p201 = pneg %p200
      $region14: #{tpu_custom_call.1} parent=5 // pred_check_branch
        %203 = sbr.rel (%p201) target = $region16
      $region15: #{tpu_custom_call.1} parent=5 // pred_region
        // Predicated region
        $region17: #{tpu_custom_call.1} parent=15 // pred_check
          %p204 = pneg %p63
        $region18: #{tpu_custom_call.1} parent=15 // pred_check_branch
          %206 = sbr.rel (%p204) target = $region20
        $region19: #{tpu_custom_call.1} parent=15 // pred_region
          %s207 = sand.u32 %s53, 1
          %s208 = scalar_lea.sflag [#allocation3], %s207
          %s209 = sand.u32 %s53, 1
          %s210 = smul.addr %s209, 8
          %s211 = scalar_lea.vmem [#allocation2], %s210
          %s213 = ssub.s32 128, 128
          %214 = vsyncadd %s208, %s213
          %s215 = smul.addr %s28, 4
          %s216 = sadd.s32 %s29, %s215
          %s217 = smul.addr %s27, 16
          %s218 = sadd.s32 %s216, %s217
          %s219 = smul.addr %s218, 128
          %s220 = scalar_lea.hbm %s0, %s219
          %s222 = sshll.u32 %s211, 4
          %s223 = int_to_ptr.vmem [resolvable:$true] %s222
          %225 = dma.hbm_to_vmem [thread:$0]  %s220, 128, %s223, %s208
        $region20: #{tpu_custom_call.1} parent=15 // pred_fallthru
          _
        // Predicated region
        $region21: #{tpu_custom_call.1} parent=15 // pred_check
          %p226 = pneg %p91
        $region22: #{tpu_custom_call.1} parent=15 // pred_check_branch
          %228 = sbr.rel (%p226) target = $region24
        $region23: #{tpu_custom_call.1} parent=15 // pred_region
          %s229 = sand.u32 %s20, 1
          %s230 = scalar_lea.sflag [#allocation6], %s229
          %s231 = sand.u32 %s81, 1
          %s232 = smul.addr %s231, 16
          %s233 = scalar_lea.vmem [#allocation5], %s232
          %s235 = ssub.s32 256, 256
          %236 = vsyncadd %s230, %s235
          %s237 = smul.addr %s28, 2
          %s238 = smul.addr %s27, 8
          %s239 = sadd.s32 %s237, %s238
          %s240 = smul.addr %s239, 128
          %s241 = scalar_lea.hbm %s1, %s240
          %s242 = sshll.u32 %s233, 4
          %s243 = int_to_ptr.vmem [resolvable:$true] %s242
          %248 = dma.hbm_to_vmem [thread:$0]  %s241, 256, %s243, %s230, 128, 128, 8
        $region24: #{tpu_custom_call.1} parent=15 // pred_fallthru
          _
        // Predicated region
        $region25: #{tpu_custom_call.1} parent=15 // pred_check
          %p249 = pneg %p119
        $region26: #{tpu_custom_call.1} parent=15 // pred_check_branch
          %251 = sbr.rel (%p249) target = $region28
        $region27: #{tpu_custom_call.1} parent=15 // pred_region
          %s252 = sand.u32 %s20, 1
          %s253 = scalar_lea.sflag [#allocation6], %s252
          %s254 = sand.u32 %s109, 1
          %s255 = smul.addr %s254, 16
          %s256 = scalar_lea.vmem [#allocation7], %s255
          %s258 = ssub.s32 256, 256
          %259 = vsyncadd %s253, %s258
          %s260 = smul.addr %s28, 2
          %s261 = smul.addr %s27, 8
          %s262 = sadd.s32 %s260, %s261
          %s263 = smul.addr %s262, 128
          %s264 = scalar_lea.hbm %s2, %s263
          %s265 = sshll.u32 %s256, 4
          %s266 = int_to_ptr.vmem [resolvable:$true] %s265
          %271 = dma.hbm_to_vmem [thread:$0]  %s264, 256, %s266, %s253, 128, 128, 8
        $region28: #{tpu_custom_call.1} parent=15 // pred_fallthru
          _
      $region16: #{tpu_custom_call.1} parent=5 // pred_fallthru
        _
      %p272 = scmp.le.s32.totalorder 1, %s20
      %p273 = scmp.lt.s32.totalorder %s20, 33
      %p274 = pnand %p272, %p273
      %p275 = pneg %p274
      // Predicated region
      $region29: #{tpu_custom_call.1} parent=5 // pred_check
        _
      $region30: #{tpu_custom_call.1} parent=5 // pred_check_branch
        %277 = sbr.rel (%p274) target = $region32
      $region31: #{tpu_custom_call.1} parent=5 // pred_region
        %s278 = ssub.s32 %s20, 1
        %s279 = sand.u32 %s56, 1
        %s280 = scalar_lea.sflag [#allocation3], %s279
        %s281 = sand.u32 %s56, 1
        %s282 = smul.addr %s281, 8
        %s283 = scalar_lea.vmem [#allocation2], %s282
        // Predicated region
        $region33: #{tpu_custom_call.1} parent=31 // pred_check
          %p284 = pneg %p69
        $region34: #{tpu_custom_call.1} parent=31 // pred_check_branch
          %286 = sbr.rel (%p284) target = $region36
        $region35: #{tpu_custom_call.1} parent=31 // pred_region
          %287 = dma.done %s280, 128
        $region36: #{tpu_custom_call.1} parent=31 // pred_fallthru
          _
        %s288 = sand.u32 %s25, 1
        %s289 = scalar_lea.sflag [#allocation6], %s288
        %s290 = sand.u32 %s84, 1
        %s291 = smul.addr %s290, 16
        %s292 = scalar_lea.vmem [#allocation5], %s291
        // Predicated region
        $region37: #{tpu_custom_call.1} parent=31 // pred_check
          %p293 = pneg %p97
        $region38: #{tpu_custom_call.1} parent=31 // pred_check_branch
          %295 = sbr.rel (%p293) target = $region40
        $region39: #{tpu_custom_call.1} parent=31 // pred_region
          %296 = dma.done %s289, 256
        $region40: #{tpu_custom_call.1} parent=31 // pred_fallthru
          _
        %s297 = sand.u32 %s25, 1
        %s298 = scalar_lea.sflag [#allocation6], %s297
        %s299 = sand.u32 %s112, 1
        %s300 = smul.addr %s299, 16
        %s301 = scalar_lea.vmem [#allocation7], %s300
        // Predicated region
        $region41: #{tpu_custom_call.1} parent=31 // pred_check
          %p302 = pneg %p125
        $region42: #{tpu_custom_call.1} parent=31 // pred_check_branch
          %304 = sbr.rel (%p302) target = $region44
        $region43: #{tpu_custom_call.1} parent=31 // pred_region
          %305 = dma.done %s298, 256
        $region44: #{tpu_custom_call.1} parent=31 // pred_fallthru
          _
        %s306 = sand.u32 %s56, 1
        %s307 = scalar_lea.sflag [#allocation3], %s306
        %s308 = sand.u32 %s56, 1
        %s309 = smul.addr %s308, 8
        %s310 = scalar_lea.vmem [#allocation2], %s309
        %p311 = pneg %p69
        %p312 = pneg %p66
        %s313 = sand.u32 %s25, 1
        %s314 = scalar_lea.sflag [#allocation6], %s313
        %s315 = sand.u32 %s84, 1
        %s316 = smul.addr %s315, 16
        %s317 = scalar_lea.vmem [#allocation5], %s316
        %p318 = pneg %p97
        %p319 = pneg %p94
        %s320 = sand.u32 %s25, 1
        %s321 = scalar_lea.sflag [#allocation6], %s320
        %s322 = sand.u32 %s112, 1
        %s323 = smul.addr %s322, 16
        %s324 = scalar_lea.vmem [#allocation7], %s323
        %p325 = pneg %p125
        %p326 = pneg %p122
        %p327 = pneg %p155
        %p328 = pneg %p152
        %s329 = sand.u32 %s142, 1
        %s330 = scalar_lea.sflag [#allocation4], %s329
        %s331 = sand.u32 %s142, 1
        %s332 = smul.addr %s331, 8
        %s333 = scalar_lea.vmem [#allocation8], %s332
        %p334 = pneg %p185
        %p335 = pneg %p182
        %p336 = scmp.lt.s32.totalorder %s30, 1
        %s337 = scalar_select %p336, %s30, 1
        %p338 = scmp.lt.s32.totalorder %s31, 3
        %s339 = scalar_select %p338, %s31, 3
        %p340 = scmp.lt.s32.totalorder %s32, 3
        %s341 = scalar_select %p340, %s32, 3
        %s342 = smul.addr %s339, 4
        %s343 = sadd.s32 %s341, %s342
        %s344 = smul.addr %s337, 16
        %s345 = sadd.s32 %s343, %s344
        %s346 = smul.addr %s345, 8
        %s347 = scalar_lea.vmem %s4, %s346
        %p348 = scmp.lt.s32.totalorder %s30, 1
        %s349 = scalar_select %p348, %s30, 1
        %p350 = scmp.lt.s32.totalorder %s31, 3
        %s351 = scalar_select %p350, %s31, 3
        %p352 = scmp.lt.s32.totalorder %s32, 3
        %s353 = scalar_select %p352, %s32, 3
        %s354 = smul.addr %s351, 4
        %s355 = sadd.s32 %s353, %s354
        %s356 = smul.addr %s349, 16
        %s357 = sadd.s32 %s355, %s356
        %s358 = smul.addr %s357, 8
        %s359 = scalar_lea.vmem %s4, %s358
        %v360 = vld [vmem:[%s283] sm:$0xff]
        %v361 = vmul.f32 %v360, 0.17677669
        %v362 = vld [vmem:[%s292] sm:$0xff]
        %v363 = vld [vmem:[%s292 + $0x8] sm:$0xff]
        %v364 = vld [vmem:[%s301] sm:$0xff]
        %v365 = vld [vmem:[%s301 + $0x8] sm:$0xff]
        %vm366 = vcmask 261120
        %v368 = vsel %vm366, %v361, 0
        %v371 = vsel %vm366, %v362, 0
        %v374 = vsel %vm366, %v363, 0
        %376 = vmatprep.subr.mxu0 0.0
        %377 = vmatpush1.xpose.msra.mxu0 0.0
        %378 = vmatprep.subr.mxu0 0.0
        %379 = vmatpush1.xpose.msra.mxu0 0.0
        %380 = vmatprep.subr.mxu0 0.0
        %381 = vmatpush1.xpose.msra.mxu0 0.0
        %382 = vmatprep.subr.mxu0 0.0
        %383 = vmatpush1.xpose.msra.mxu0 0.0
        %384 = vmatprep.subr.mxu0 0.0
        %385 = vmatpush1.xpose.msra.mxu0 0.0
        %386 = vmatprep.subr.mxu0 0.0
        %387 = vmatpush1.xpose.msra.mxu0 0.0
        %388 = vmatprep.subr.mxu0 0.0
        %389 = vmatpush1.xpose.msra.mxu0 0.0
        %390 = vmatprep.subr.mxu0 0.0
        %391 = vmatpush1.xpose.msra.mxu0 0.0
        %392 = vmatprep.subr.mxu0 0.0
        %393 = vmatpush1.xpose.msra.mxu0 0.0
        %394 = vmatprep.subr.mxu0 0.0
        %395 = vmatpush1.xpose.msra.mxu0 0.0
        %396 = vmatprep.subr.mxu0 0.0
        %397 = vmatpush1.xpose.msra.mxu0 0.0
        %398 = vmatprep.subr.mxu0 0.0
        %399 = vmatpush1.xpose.msra.mxu0 0.0
        %400 = vmatprep.subr.mxu0 0.0
        %401 = vmatpush1.xpose.msra.mxu0 0.0
        %402 = vmatprep.subr.mxu0 0.0
        %403 = vmatpush1.xpose.msra.mxu0 0.0
        %404 = vmatprep.subr.mxu0 0.0
        %405 = vmatpush1.xpose.msra.mxu0 %v374
        %406 = vmatprep.subr.mxu0 0.0
        %407 = vmatpush1.xpose.msra.mxu0 %v371
        %408 = vmatprep.subr.mxu0 0.0
        %409 = vmatpush2.xpose.msra.mxu0 0.0
        %410 = vmatprep.subr.mxu0 0.0
        %411 = vmatpush2.xpose.msra.mxu0 0.0
        %412 = vmatprep.subr.mxu0 0.0
        %413 = vmatpush2.xpose.msra.mxu0 0.0
        %414 = vmatprep.subr.mxu0 0.0
        %415 = vmatpush2.xpose.msra.mxu0 0.0
        %416 = vmatprep.subr.mxu0 0.0
        %417 = vmatpush2.xpose.msra.mxu0 0.0
        %418 = vmatprep.subr.mxu0 0.0
        %419 = vmatpush2.xpose.msra.mxu0 0.0
        %420 = vmatprep.subr.mxu0 0.0
        %421 = vmatpush2.xpose.msra.mxu0 0.0
        %422 = vmatprep.subr.mxu0 0.0
        %423 = vmatpush2.xpose.msra.mxu0 0.0
        %424 = vmatprep.subr.mxu0 0.0
        %425 = vmatpush2.xpose.msra.mxu0 0.0
        %426 = vmatprep.subr.mxu0 0.0
        %427 = vmatpush2.xpose.msra.mxu0 0.0
        %428 = vmatprep.subr.mxu0 0.0
        %429 = vmatpush2.xpose.msra.mxu0 0.0
        %430 = vmatprep.subr.mxu0 0.0
        %431 = vmatpush2.xpose.msra.mxu0 0.0
        %432 = vmatprep.subr.mxu0 0.0
        %433 = vmatpush2.xpose.msra.mxu0 0.0
        %434 = vmatprep.subr.mxu0 0.0
        %435 = vmatpush2.xpose.msra.mxu0 0.0
        %436 = vmatprep.subr.mxu0 0.0
        %437 = vmatpush2.xpose.msra.mxu0 0.0
        %438 = vmatprep.subr.mxu0 0.0
        %439 = vmatpush2.xpose.msra.mxu0 0.0
        %440 = vmatprep.mubr.f32.mxu0 0.0
        %441 = vmatmul.mubr.f32.gmra.mxu0 %v368
        %v442 = vpop.f32.mrf.mxu0
        %v443 = vadd.f32 0.0, %v442
        %v444 = vpop.f32.mrf.mxu0
        %445 = vdwg.mxu0
        %vm446 = vcmask 130048
        %v447 = vsel %vm446, %v443, -inf
        %448 = vmax.xlane.f32.xlu0 %v447
        %v449 = vpop.xlane.xlu0 %448
        %v450 = vsub.f32 %v443, %v449
        %v451 = vmul.f32 %v450, 1.442695
        %v452 = vpow.pop %v451
        %v453 = vsel %vm446, %v452, 0.0
        %454 = vadd.xlane.f32.xlu0 %v453
        %v455 = vpop.xlane.xlu0 %454
        %v456 = vrcp.pop %v455
        %v457 = vmul.f32 %v452, %v456
        %v459 = vsel %vm446, %v457, 0
        %461 = vmatprep.subr.mxu0 0.0
        %462 = vmatpush1.msra.mxu0 0.0
        %463 = vmatprep.subr.mxu0 0.0
        %464 = vmatpush1.msra.mxu0 0.0
        %465 = vmatprep.subr.mxu0 0.0
        %466 = vmatpush1.msra.mxu0 0.0
        %467 = vmatprep.subr.mxu0 0.0
        %468 = vmatpush1.msra.mxu0 0.0
        %469 = vmatprep.subr.mxu0 0.0
        %470 = vmatpush1.msra.mxu0 0.0
        %471 = vmatprep.subr.mxu0 0.0
        %472 = vmatpush1.msra.mxu0 0.0
        %473 = vmatprep.subr.mxu0 0.0
        %474 = vmatpush1.msra.mxu0 0.0
        %475 = vmatprep.subr.mxu0 0.0
        %476 = vmatpush1.msra.mxu0 0.0
        %477 = vmatprep.subr.mxu0 0.0
        %478 = vmatpush1.msra.mxu0 0.0
        %479 = vmatprep.subr.mxu0 0.0
        %480 = vmatpush1.msra.mxu0 0.0
        %481 = vmatprep.subr.mxu0 0.0
        %482 = vmatpush1.msra.mxu0 0.0
        %483 = vmatprep.subr.mxu0 0.0
        %484 = vmatpush1.msra.mxu0 0.0
        %485 = vmatprep.subr.mxu0 0.0
        %486 = vmatpush1.msra.mxu0 0.0
        %487 = vmatprep.subr.mxu0 0.0
        %488 = vmatpush1.msra.mxu0 0.0
        %489 = vmatprep.subr.mxu0 0.0
        %490 = vmatpush1.msra.mxu0 %v365
        %491 = vmatprep.subr.mxu0 0.0
        %492 = vmatpush1.msra.mxu0 %v364
        %493 = vmatprep.subr.mxu0 0.0
        %494 = vmatpush2.msra.mxu0 0.0
        %495 = vmatprep.subr.mxu0 0.0
        %496 = vmatpush2.msra.mxu0 0.0
        %497 = vmatprep.subr.mxu0 0.0
        %498 = vmatpush2.msra.mxu0 0.0
        %499 = vmatprep.subr.mxu0 0.0
        %500 = vmatpush2.msra.mxu0 0.0
        %501 = vmatprep.subr.mxu0 0.0
        %502 = vmatpush2.msra.mxu0 0.0
        %503 = vmatprep.subr.mxu0 0.0
        %504 = vmatpush2.msra.mxu0 0.0
        %505 = vmatprep.subr.mxu0 0.0
        %506 = vmatpush2.msra.mxu0 0.0
        %507 = vmatprep.subr.mxu0 0.0
        %508 = vmatpush2.msra.mxu0 0.0
        %509 = vmatprep.subr.mxu0 0.0
        %510 = vmatpush2.msra.mxu0 0.0
        %511 = vmatprep.subr.mxu0 0.0
        %512 = vmatpush2.msra.mxu0 0.0
        %513 = vmatprep.subr.mxu0 0.0
        %514 = vmatpush2.msra.mxu0 0.0
        %515 = vmatprep.subr.mxu0 0.0
        %516 = vmatpush2.msra.mxu0 0.0
        %517 = vmatprep.subr.mxu0 0.0
        %518 = vmatpush2.msra.mxu0 0.0
        %519 = vmatprep.subr.mxu0 0.0
        %520 = vmatpush2.msra.mxu0 0.0
        %521 = vmatprep.subr.mxu0 0.0
        %522 = vmatpush2.msra.mxu0 0.0
        %523 = vmatprep.subr.mxu0 0.0
        %524 = vmatpush2.msra.mxu0 0.0
        %525 = vmatprep.mubr.f32.mxu0 0.0
        %526 = vmatmul.mubr.f32.gmra.mxu0 %v459
        %v527 = vpop.f32.mrf.mxu0
        %v528 = vadd.f32 0.0, %v527
        %v529 = vpop.f32.mrf.mxu0
        %530 = vdwg.mxu0
        %531 = vst.msk [vmem:[%s359] sm:$0xff] %vm446, %v457
        %532 = vst.msk [vmem:[%s333] sm:$0xff] %vm366, %v528
        %s533 = sand.u32 %s142, 1
        %s534 = scalar_lea.sflag [#allocation4], %s533
        %s535 = sand.u32 %s142, 1
        %s536 = smul.addr %s535, 8
        %s537 = scalar_lea.vmem [#allocation8], %s536
        %p538 = scmp.lt.s32.totalorder %s30, 1
        %s539 = scalar_select %p538, %s30, 1
        %p540 = scmp.lt.s32.totalorder %s31, 3
        %s541 = scalar_select %p540, %s31, 3
        %p542 = scmp.lt.s32.totalorder %s32, 3
        %s543 = scalar_select %p542, %s32, 3
        %s544 = smul.addr %s541, 4
        %s545 = sadd.s32 %s543, %s544
        %s546 = smul.addr %s539, 16
        %s547 = sadd.s32 %s545, %s546
        %s548 = smul.addr %s547, 8
        %s549 = scalar_lea.vmem %s4, %s548
        // Predicated region
        $region45: #{tpu_custom_call.1} parent=31 // pred_check
          %p550 = pneg %p152
        $region46: #{tpu_custom_call.1} parent=31 // pred_check_branch
          %552 = sbr.rel (%p550) target = $region48
        $region47: #{tpu_custom_call.1} parent=31 // pred_region
          %s554 = ssub.s32 128, 128
          %555 = vsyncadd %s534, %s554
          %s556 = smul.addr %s31, 4
          %s557 = sadd.s32 %s32, %s556
          %s558 = smul.addr %s30, 16
          %s559 = sadd.s32 %s557, %s558
          %s560 = smul.addr %s559, 128
          %s561 = scalar_lea.hbm %s3, %s560
          %s563 = sshll.u32 %s537, 4
          %s564 = int_to_ptr.vmem [resolvable:$true] %s563
          %566 = dma.vmem_to_hbm [thread:$0]  %s564, 128, %s561, %s534
        $region48: #{tpu_custom_call.1} parent=31 // pred_fallthru
          _
        // Predicated region
        $region49: #{tpu_custom_call.1} parent=31 // pred_check
          %p567 = pneg %p182
        $region50: #{tpu_custom_call.1} parent=31 // pred_check_branch
          %569 = sbr.rel (%p567) target = $region52
        $region51: #{tpu_custom_call.1} parent=31 // pred_region
          _
        $region52: #{tpu_custom_call.1} parent=31 // pred_fallthru
          _
      $region32: #{tpu_custom_call.1} parent=5 // pred_fallthru
        _
      %p570 = scmp.le.s32.totalorder 2, %s20
      // Predicated region
      $region53: #{tpu_custom_call.1} parent=5 // pred_check
        %p571 = pneg %p570
      $region54: #{tpu_custom_call.1} parent=5 // pred_check_branch
        %573 = sbr.rel (%p571) target = $region56
      $region55: #{tpu_custom_call.1} parent=5 // pred_region
        %s574 = ssub.s32 %s20, 2
        // Predicated region
        $region57: #{tpu_custom_call.1} parent=55 // pred_check
          %p575 = pneg %p158
        $region58: #{tpu_custom_call.1} parent=55 // pred_check_branch
          %577 = sbr.rel (%p575) target = $region60
        $region59: #{tpu_custom_call.1} parent=55 // pred_region
          %s578 = sand.u32 %s143, 1
          %s579 = scalar_lea.sflag [#allocation4], %s578
          %s580 = sand.u32 %s143, 1
          %s581 = smul.addr %s580, 8
          %s582 = scalar_lea.vmem [#allocation8], %s581
          %583 = dma.done %s579, 128
        $region60: #{tpu_custom_call.1} parent=55 // pred_fallthru
          _
        // Predicated region
        $region61: #{tpu_custom_call.1} parent=55 // pred_check
          %p584 = pneg %p188
        $region62: #{tpu_custom_call.1} parent=55 // pred_check_branch
          %586 = sbr.rel (%p584) target = $region64
        $region63: #{tpu_custom_call.1} parent=55 // pred_region
          %p587 = scmp.lt.s32.totalorder %s33, 1
          %s588 = scalar_select %p587, %s33, 1
          %p589 = scmp.lt.s32.totalorder %s34, 3
          %s590 = scalar_select %p589, %s34, 3
          %p591 = scmp.lt.s32.totalorder %s35, 3
          %s592 = scalar_select %p591, %s35, 3
          %s593 = smul.addr %s590, 4
          %s594 = sadd.s32 %s592, %s593
          %s595 = smul.addr %s588, 16
          %s596 = sadd.s32 %s594, %s595
          %s597 = smul.addr %s596, 8
          %s598 = scalar_lea.vmem %s4, %s597
        $region64: #{tpu_custom_call.1} parent=55 // pred_fallthru
          _
      $region56: #{tpu_custom_call.1} parent=5 // pred_fallthru
        _
    $region6: #{tpu_custom_call.1} parent=1 // loop_footer
      %s24 = sadd.s32 1, %s20
    $region7: #{tpu_custom_call.1} parent=1 // loop_footer_branch
      %19 = sbr.rel target = $region3
    $region8: #{tpu_custom_call.1} parent=1 // loop_exit
      _
    %599 = vsyncpa [#allocation3], 1
    %s600 = scalar_lea.sflag [#allocation3], 1
    %601 = vsyncpa %s600, 1
    %602 = vsyncpa [#allocation6], 1
    %s603 = scalar_lea.sflag [#allocation6], 1
    %604 = vsyncpa %s603, 1
    %605 = vsyncpa [#allocation4], 1
    %s606 = scalar_lea.sflag [#allocation4], 1
    %607 = vsyncpa %s606, 1

</llo_original>
